<compile_context>
chip_gen: v6e
topology: v6e:2x2x1
jax: 0.10.0
libtpu: 0.0.40
codegen_flags: <defaults>
</compile_context>

<pallas_src>
import functools
import math

import jax
import jax.numpy as jnp
from jax.experimental import pallas as pl
from jax.experimental.pallas import tpu as pltpu

_MASK_NONE = "none"
_MASK_2D = "k2d"      # kernel sees a (tq, tkv) bf16 penalty tile (shared / per-batch)
_MASK_3D = "k3d"      # kernel sees a (Hb, tq, tkv) bf16 penalty tile (per-head)


def _flash_attn_kernel(*refs, scale, mask_kind, is_causal, kv_len, t_pad,
                       tq, tkv, approx):
    """One grid step = (head-group h, q-tile qi, kv-tile ki).

    Online-softmax accumulation over the kv axis (last grid axis, "arbitrary").
    The output block index is constant across ki, so the output tile is
    resident and written once on the final kv step.
    """
    if mask_kind == _MASK_NONE:
        q_ref, k_ref, v_ref, o_ref, qs_sc, m_sc, l_sc, acc_sc = refs
        mask_ref = None
    else:
        q_ref, k_ref, v_ref, mask_ref, o_ref, qs_sc, m_sc, l_sc, acc_sc = refs

    qi = pl.program_id(1)
    ki = pl.program_id(2)

    @pl.when(ki == 0)
    def _init():
        # Fold the 1/sqrt(hs) scale into q once per (h, qi) tile (reused for
        # every kv step) instead of scaling the full score matrix per step.
        qs_sc[...] = (q_ref[...].astype(jnp.float32)
                      * jnp.float32(scale)).astype(qs_sc.dtype)
        m_sc[...] = jnp.full(m_sc.shape, -jnp.inf, dtype=jnp.float32)
        l_sc[...] = jnp.zeros(l_sc.shape, dtype=jnp.float32)
        acc_sc[...] = jnp.zeros(acc_sc.shape, dtype=jnp.float32)

    def _body():
        # q/k stay in their input dtype on the MXU; contraction over the last
        # (lane-contiguous) dim -> no materialized k transpose; f32 accumulate.
        s = jnp.einsum("hqd,hkd->hqk", qs_sc[...], k_ref[...],
                       preferred_element_type=jnp.float32)

        if mask_kind == _MASK_2D:
            # bf16 additive penalty (already pre-multiplied by -1e9 on host),
            # shared by every head in the group.
            s = s + mask_ref[...].astype(jnp.float32)[None, :, :]
        elif mask_kind == _MASK_3D:
            s = s + mask_ref[...].astype(jnp.float32)

        if is_causal:
            row = qi * tq + jax.lax.broadcasted_iota(jnp.int32, (tq, tkv), 0)
            col = ki * tkv + jax.lax.broadcasted_iota(jnp.int32, (tq, tkv), 1)
            s = jnp.where((col > row)[None, :, :], s + jnp.float32(-1e9), s)
        elif kv_len < t_pad:
            # Mask padded kv columns (T was rounded up to a tile multiple).
            col = ki * tkv + jax.lax.broadcasted_iota(jnp.int32, (tq, tkv), 1)
            s = jnp.where((col >= kv_len)[None, :, :], s + jnp.float32(-1e9), s)

        m_prev = m_sc[...]
        m_new = jnp.maximum(m_prev, jnp.max(s, axis=-1, keepdims=True))
        alpha = jnp.exp(m_prev - m_new)
        p = jnp.exp(s - m_new)

        l_sc[...] = alpha * l_sc[...] + jnp.sum(p, axis=-1, keepdims=True)
        acc_sc[...] = alpha * acc_sc[...] + jnp.einsum(
            "hqk,hkd->hqd", p.astype(v_ref.dtype), v_ref[...],
            preferred_element_type=jnp.float32)
        m_sc[...] = m_new

    if is_causal:
        # Skip kv tiles that lie entirely above the diagonal (their DMA is
        # also elided via the clamped index_map in the wrapper).
        pl.when(ki * tkv <= qi * tq + (tq - 1))(_body)
    else:
        _body()

    @pl.when(ki == pl.num_programs(2) - 1)
    def _finalize():
        inv_l = pl.reciprocal(l_sc[...], approx=approx)
        o_ref[...] = (acc_sc[...] * inv_l).astype(o_ref.dtype)


# ---------------------------------------------------------------------------
# host-side helpers
# ---------------------------------------------------------------------------

def _physical_vmem_bytes():
    try:
        info = pltpu.get_tpu_info()
        v = getattr(info, "vmem_capacity_bytes", None)
        if v:
            return int(v)
    except Exception:
        pass
    return 64 * 1024 * 1024   # conservative (v7x per-TensorCore VMEM)


def _pick_seq_tile(T):
    """Return (tile, T_pad): full T when small, else a 128-multiple tile.

    For large T that is not a multiple of 128 we pad to the next multiple of
    128 instead of falling back to one huge T x T tile (old VMEM-blowup bug).
    """
    if T <= 512:
        return T, T
    for t in (512, 256, 128):
        if T % t == 0:
            return t, T
    t = 128
    return t, ((T + t - 1) // t) * t


def _estimate_vmem_bytes(hb, tq, tkv, hs, in_item, has_mask, per_head_mask):
    db = 2                                            # double buffering
    qkv_in = db * hb * (tq + 2 * tkv) * hs * in_item
    out = db * hb * tq * hs * in_item
    scratch = hb * tq * hs * in_item                  # scaled-q copy
    scratch += hb * tq * (hs + 2) * 4                 # f32 acc + m + l
    if not has_mask:
        mask_b = 0
    elif per_head_mask:
        mask_b = db * hb * tq * tkv * 2               # bf16 penalty tiles
    else:
        mask_b = db * tq * tkv * 2
    # Generously padded f32 temporaries: scores, exp(p), p cast for the PV
    # matmul, mask/iota broadcasts, alpha-scaled accumulator copies.
    tmp = hb * tq * tkv * (4 + 4 + in_item + 4) + 2 * hb * tq * hs * 4
    return int(1.15 * (qkv_in + out + scratch + mask_b + tmp)) + (2 << 20)


def _select_tiling(BH, nh, T, hs, in_item, has_mask, per_head_mask, budget,
                   need_nh_divisor):
    tile, T_pad = _pick_seq_tile(T)
    tq = tkv = tile

    def est(hb, a, b):
        return _estimate_vmem_bytes(hb, a, b, hs, in_item, has_mask,
                                    per_head_mask)

    # Shrink kv (then q) tiles until a single head-group fits the budget.
    while (est(1, tq, tkv) > budget and tkv >= 256
           and (tkv // 2) % 128 == 0 and T_pad % (tkv // 2) == 0):
        tkv //= 2
    while (est(1, tq, tkv) > budget and tq >= 256
           and (tq // 2) % 128 == 0 and T_pad % (tq // 2) == 0):
        tq //= 2

    # Heads per grid step: amortize the ~0.35us per-step overhead.  Target
    # ~512K score elements per step; bound by VMEM and keep at least one
    # "parallel" grid axis >= 2 when possible (v7x megacore sharding).
    base = nh if need_nh_divisor else BH
    target_elems = 512 * 1024
    cap = min(16, max(1, -(-target_elems // (tq * tkv))))
    cands = sorted((d for d in range(1, base + 1) if base % d == 0),
                   reverse=True)
    hb = 1
    for prefer_parallel in (True, False):
        found = None
        for d in cands:
            if d > cap:
                continue
            if est(d, tq, tkv) > budget:
                continue
            if prefer_parallel and BH // d < 2 and T_pad // tq < 2:
                continue
            found = d
            break
        if found is not None:
            hb = found
            break
    return hb, tq, tkv, T_pad


def _prepare_mask(mask, B, nh, T):
    """Normalize mask to a minimally-broadcast bf16 additive penalty."""
    m = jnp.asarray(mask)
    if m.ndim > 4:
        raise ValueError("mask must be broadcastable to (B, nh, T, T)")
    m = m.reshape((1,) * (4 - m.ndim) + m.shape)
    for d, full in zip(m.shape, (B, nh, T, T)):
        if d not in (1, full):
            raise ValueError("mask must be broadcastable to (B, nh, T, T)")
    # Pre-multiply by -1e9 and store bf16: halves HBM traffic vs f32 and
    # removes the per-step vmul over the score matrix.
    pen = (m.astype(jnp.float32) * jnp.float32(-1e9)).astype(jnp.bfloat16)
    Bm, Hm = pen.shape[0], pen.shape[1]
    if Bm == 1 and Hm == 1:
        return "shared", jnp.broadcast_to(pen[0, 0], (T, T))
    if Hm == 1:
        # per-batch mask: keep (B, T, T); head broadcast lives in the index_map
        return "batch", jnp.broadcast_to(pen[:, 0], (B, T, T))
    arr = jnp.broadcast_to(pen, (B, nh, T, T)).reshape(B * nh, T, T)
    return "per_head", arr


# ---------------------------------------------------------------------------
# public wrapper
# ---------------------------------------------------------------------------

def scaled_dot_product_attention(query, key, value, mask=None, *,
                                 is_causal=False,
                                 approx_reciprocal=False,
                                 matmul_dtype=None):
    """Pallas equivalent of ScaledDotProductAttention.forward.

    query/key/value: (B, nh, T, hs).  mask (optional): broadcastable to
    (B, nh, T, T); positions with mask==1 get -1e9 added before softmax
    (matching the PyTorch module; fully-masked rows degenerate to a
    near-uniform softmax — intentional, same as the reference).
    `is_causal=True` additionally applies an in-kernel causal mask and skips
    fully-masked kv tiles.  `matmul_dtype=jnp.bfloat16` casts q/k/v for the
    matmuls (recommended on v5e).  Returns (B, nh, T, hs) in query's dtype.
    """
    query = jnp.asarray(query)
    key = jnp.asarray(key)
    value = jnp.asarray(value)
    B, nh, T, hs = query.shape
    BH = B * nh
    out_dtype = query.dtype
    scale = 1.0 / math.sqrt(hs)

    if matmul_dtype is not None:
        query = query.astype(matmul_dtype)
        key = key.astype(matmul_dtype)
        value = value.astype(matmul_dtype)

    # ---- mask normalization ------------------------------------------------
    if mask is None:
        mask_layout, mask_arr = None, None
        mask_kind = _MASK_NONE
    else:
        mask_layout, mask_arr = _prepare_mask(mask, B, nh, T)
        mask_kind = _MASK_3D if mask_layout == "per_head" else _MASK_2D
    need_nh_divisor = (mask_layout == "batch")
    per_head_mask = (mask_layout == "per_head")
    has_mask = mask_arr is not None

    # ---- generation-aware tiling --------------------------------------------
    in_item = query.dtype.itemsize
    physical = _physical_vmem_bytes()
    budget = int(0.40 * physical)
    Hb, tq, tkv, T_pad = _select_tiling(BH, nh, T, hs, in_item, has_mask,
                                        per_head_mask, budget,
                                        need_nh_divisor)

    # ---- padding (odd large T) ----------------------------------------------
    q = query.reshape(BH, T, hs)
    k = key.reshape(BH, T, hs)
    v = value.reshape(BH, T, hs)
    if T_pad != T:
        pad = [(0, 0), (0, T_pad - T), (0, 0)]
        q = jnp.pad(q, pad)
        k = jnp.pad(k, pad)
        v = jnp.pad(v, pad)
        if mask_arr is not None:
            mpad = [(0, 0)] * (mask_arr.ndim - 2) + \
                   [(0, T_pad - T), (0, T_pad - T)]
            mask_arr = jnp.pad(mask_arr, mpad)

    grid = (BH // Hb, T_pad // tq, T_pad // tkv)

    # ---- index maps ----------------------------------------------------------
    if is_causal:
        def _clamp_kv(qi, ki):
            # Clamp to the last kv block the q-tile actually needs; skipped
            # steps then reuse the previous block index -> no extra DMA.
            return jnp.minimum(ki, (qi * tq + (tq - 1)) // tkv)
    else:
        def _clamp_kv(qi, ki):
            return ki

    qo_map = lambda h, qi, ki: (h, qi, 0)
    kv_map = lambda h, qi, ki: (h, _clamp_kv(qi, ki), 0)

    in_specs = [
        pl.BlockSpec((Hb, tq, hs), qo_map),
        pl.BlockSpec((Hb, tkv, hs), kv_map),
        pl.BlockSpec((Hb, tkv, hs), kv_map),
    ]
    operands = [q, k, v]

    if mask_layout == "shared":
        in_specs.append(pl.BlockSpec(
            (tq, tkv), lambda h, qi, ki: (qi, _clamp_kv(qi, ki))))
        operands.append(mask_arr)
    elif mask_layout == "batch":
        # head broadcast expressed in the index_map (Hb divides nh by
        # construction), first dim squeezed -> kernel sees a (tq, tkv) tile.
        in_specs.append(pl.BlockSpec(
            (None, tq, tkv),
            lambda h, qi, ki: ((h * Hb) // nh, qi, _clamp_kv(qi, ki))))
        operands.append(mask_arr)
    elif mask_layout == "per_head":
        in_specs.append(pl.BlockSpec(
            (Hb, tq, tkv), lambda h, qi, ki: (h, qi, _clamp_kv(qi, ki))))
        operands.append(mask_arr)

    out_spec = pl.BlockSpec((Hb, tq, hs), qo_map)

    scratch_shapes = [
        pltpu.VMEM((Hb, tq, hs), query.dtype),    # pre-scaled q (input dtype)
        pltpu.VMEM((Hb, tq, 1), jnp.float32),     # running max
        pltpu.VMEM((Hb, tq, 1), jnp.float32),     # running sum
        pltpu.VMEM((Hb, tq, hs), jnp.float32),    # output accumulator
    ]

    est_final = _estimate_vmem_bytes(Hb, tq, tkv, hs, in_item, has_mask,
                                     per_head_mask)
    vmem_limit = max(32 * 1024 * 1024, int(1.5 * est_final))
    vmem_limit = min(vmem_limit, int(0.75 * physical))   # <=48 MiB on v7x

    kernel = functools.partial(
        _flash_attn_kernel,
        scale=scale, mask_kind=mask_kind, is_causal=is_causal,
        kv_len=T, t_pad=T_pad, tq=tq, tkv=tkv, approx=approx_reciprocal)

    out = pl.pallas_call(
        kernel,
        out_shape=jax.ShapeDtypeStruct((BH, T_pad, hs), out_dtype),
        grid_spec=pltpu.PrefetchScalarGridSpec(
            num_scalar_prefetch=0,
            grid=grid,
            in_specs=in_specs,
            out_specs=out_spec,
            scratch_shapes=scratch_shapes,
        ),
        compiler_params=pltpu.CompilerParams(
            dimension_semantics=("parallel", "parallel", "arbitrary"),
            vmem_limit_bytes=vmem_limit,
        ),
    )(*operands)

    if T_pad != T:
        out = out[:, :T, :]
    return out.reshape(B, nh, T, hs)


# ---------------------------------------------------------------------------
# reference + tests
# ---------------------------------------------------------------------------

def _reference(query, key, value, mask=None):
    q = query.astype(jnp.float32)
    k = key.astype(jnp.float32)
    v = value.astype(jnp.float32)
    hs = q.shape[-1]
    s = jnp.einsum("bhqd,bhkd->bhqk", q, k) / jnp.sqrt(jnp.float32(hs))
    if mask is not None:
        s = s + jnp.asarray(mask, jnp.float32) * jnp.float32(-1e9)
    w = jax.nn.softmax(s, axis=-1)
    return jnp.einsum("bhqk,bhkd->bhqd", w, v)


def _check(got, want, tol, msg):
    got = jnp.asarray(got, jnp.float32)
    want = jnp.asarray(want, jnp.float32)
    assert got.shape == want.shape, msg
    assert jnp.allclose(got, want, atol=tol, rtol=tol), msg


if __name__ == "__main__":
    key0 = jax.random.PRNGKey(0)
    k1, k2, k3, k4, k5 = jax.random.split(key0, 5)

    # small shape matching the module's (B, nh, T, hs) convention
    B, nh, T, hs = 2, 4, 8, 32
    q = jax.random.normal(k1, (B, nh, T, hs), dtype=jnp.float32)
    k = jax.random.normal(k2, (B, nh, T, hs), dtype=jnp.float32)
    v = jax.random.normal(k3, (B, nh, T, hs), dtype=jnp.float32)
    tol32 = 2e-3

    # 1) unmasked
    out = scaled_dot_product_attention(q, k, v)
    jax.block_until_ready(out)
    _check(out, _reference(q, k, v), tol32, "unmasked mismatch")

    # 2) shared causal mask passed explicitly (streamed as a single bf16 tile)
    causal = (jnp.arange(T)[:, None] < jnp.arange(T)[None, :]).astype(jnp.float32)
    out_m = scaled_dot_product_attention(q, k, v, mask=causal)
    jax.block_until_ready(out_m)
    _check(out_m, _reference(q, k, v, mask=causal), tol32, "shared-mask mismatch")

    # 3) is_causal flag: in-kernel mask generation + kv-tile skipping
    out_c = scaled_dot_product_attention(q, k, v, is_causal=True)
    jax.block_until_ready(out_c)
    _check(out_c, _reference(q, k, v, mask=causal), tol32, "is_causal mismatch")

    # 4) per-batch mask (B, 1, T, T): broadcast over heads via index_map only
    b_mask = (jax.random.uniform(k4, (B, 1, T, T)) < 0.25).astype(jnp.float32)
    out_b = scaled_dot_product_attention(q, k, v, mask=b_mask)
    jax.block_until_ready(out_b)
    _check(out_b, _reference(q, k, v, mask=b_mask), tol32, "per-batch-mask mismatch")

    # 5) genuinely per-(batch, head) mask
    ph_mask = (jax.random.uniform(k5, (B, nh, T, T)) < 0.25).astype(jnp.float32)
    out_p = scaled_dot_product_attention(q, k, v, mask=ph_mask)
    jax.block_until_ready(out_p)
    _check(out_p, _reference(q, k, v, mask=ph_mask), tol32, "per-head-mask mismatch")

    # 6) larger sequence, bf16 operands, causal: multi-tile flash path with
    #    head batching, tile skipping and bf16 MXU
    B2, nh2, T2, hs2 = 1, 2, 1024, 64
    kq, kk, kv2 = jax.random.split(jax.random.PRNGKey(1), 3)
    q2 = jax.random.normal(kq, (B2, nh2, T2, hs2), dtype=jnp.bfloat16)
    k2_ = jax.random.normal(kk, (B2, nh2, T2, hs2), dtype=jnp.bfloat16)
    v2 = jax.random.normal(kv2, (B2, nh2, T2, hs2), dtype=jnp.bfloat16)
    causal2 = (jnp.arange(T2)[:, None] < jnp.arange(T2)[None, :]).astype(jnp.float32)
    out2 = scaled_dot_product_attention(q2, k2_, v2, is_causal=True)
    jax.block_until_ready(out2)
    _check(out2, _reference(q2, k2_, v2, mask=causal2), 2e-2,
           "large-T bf16 causal mismatch")

    # 7) odd large T (not a multiple of 128): exercises padding + in-kernel
    #    length masking of padded kv columns
    B3, nh3, T3, hs3 = 1, 2, 576, 64
    kq3, kk3, kv3 = jax.random.split(jax.random.PRNGKey(2), 3)
    q3 = jax.random.normal(kq3, (B3, nh3, T3, hs3), dtype=jnp.float32)
    k3_ = jax.random.normal(kk3, (B3, nh3, T3, hs3), dtype=jnp.float32)
    v3 = jax.random.normal(kv3, (B3, nh3, T3, hs3), dtype=jnp.float32)
    out3 = scaled_dot_product_attention(q3, k3_, v3)
    jax.block_until_ready(out3)
    _check(out3, _reference(q3, k3_, v3), tol32, "padded-T mismatch")

    print("KERNEL_OK")
</pallas_src>

<mosaic_0001>
module attributes {stable_mosaic.version = 11 : i64} {
  func.func @_flash_attn_kernel(%arg0: i32, %arg1: i32, %arg2: i32, %arg3: memref<4x8x32xf32, #tpu.memory_space<vmem>>, %arg4: memref<4x8x32xf32, #tpu.memory_space<vmem>>, %arg5: memref<4x8x32xf32, #tpu.memory_space<vmem>>, %arg6: memref<4x8x32xf32, #tpu.memory_space<vmem>>, %arg7: memref<4x8x32xf32, #tpu.memory_space<vmem>>, %arg8: memref<4x8x1xf32, #tpu.memory_space<vmem>>, %arg9: memref<4x8x1xf32, #tpu.memory_space<vmem>>, %arg10: memref<4x8x32xf32, #tpu.memory_space<vmem>>) attributes {dimension_semantics = [#tpu.dimension_semantics<parallel>, #tpu.dimension_semantics<parallel>, #tpu.dimension_semantics<arbitrary>], iteration_bounds = array<i64: 2, 1, 1>, scalar_prefetch = 0 : i64, scratch_operands = 4 : i64, tpu.core_type = #tpu.core_type<tc>, window_params = [{transform_indices = @transform_0, window_bounds = array<i64: 4, 8, 32>}, {transform_indices = @transform_1, window_bounds = array<i64: 4, 8, 32>}, {transform_indices = @transform_2, window_bounds = array<i64: 4, 8, 32>}, {transform_indices = @transform_3, window_bounds = array<i64: 4, 8, 32>}]} {
    %c0_i32 = arith.constant 0 : i32
    %0 = arith.cmpi eq, %arg2, %c0_i32 : i32
    %1 = arith.extui %0 : i1 to i32
    %c0_i32_0 = arith.constant 0 : i32
    %2 = arith.cmpi ne, %1, %c0_i32_0 : i32
    scf.if %2 {
      %c0_32 = arith.constant 0 : index
      %c0_33 = arith.constant 0 : index
      %c0_34 = arith.constant 0 : index
      %32 = vector.load %arg3[%c0_32, %c0_33, %c0_34] : memref<4x8x32xf32, #tpu.memory_space<vmem>>, vector<4x8x32xf32>
      %cst_35 = arith.constant 0.176776692 : f32
      %33 = vector.broadcast %cst_35 : f32 to vector<4x8x32xf32>
      %34 = arith.mulf %32, %33 : vector<4x8x32xf32>
      %c0_36 = arith.constant 0 : index
      %c0_37 = arith.constant 0 : index
      %c0_38 = arith.constant 0 : index
      %35 = vector.load %arg7[%c0_36, %c0_37, %c0_38] : memref<4x8x32xf32, #tpu.memory_space<vmem>>, vector<4x8x32xf32>
      tpu.vector_store %arg7[%c0_36, %c0_37, %c0_38], %34 {strides = array<i32>} : memref<4x8x32xf32, #tpu.memory_space<vmem>>, vector<4x8x32xf32>,
      %cst_39 = arith.constant 0xFF800000 : f32
      %36 = vector.broadcast %cst_39 : f32 to vector<4x8x1xf32>
      %c0_40 = arith.constant 0 : index
      %c0_41 = arith.constant 0 : index
      %c0_42 = arith.constant 0 : index
      %37 = vector.load %arg8[%c0_40, %c0_41, %c0_42] : memref<4x8x1xf32, #tpu.memory_space<vmem>>, vector<4x8x1xf32>
      tpu.vector_store %arg8[%c0_40, %c0_41, %c0_42], %36 {strides = array<i32>} : memref<4x8x1xf32, #tpu.memory_space<vmem>>, vector<4x8x1xf32>,
      %cst_43 = arith.constant 0.000000e+00 : f32
      %38 = vector.broadcast %cst_43 : f32 to vector<4x8x1xf32>
      %c0_44 = arith.constant 0 : index
      %c0_45 = arith.constant 0 : index
      %c0_46 = arith.constant 0 : index
      %39 = vector.load %arg9[%c0_44, %c0_45, %c0_46] : memref<4x8x1xf32, #tpu.memory_space<vmem>>, vector<4x8x1xf32>
      tpu.vector_store %arg9[%c0_44, %c0_45, %c0_46], %38 {strides = array<i32>} : memref<4x8x1xf32, #tpu.memory_space<vmem>>, vector<4x8x1xf32>,
      %cst_47 = arith.constant 0.000000e+00 : f32
      %40 = vector.broadcast %cst_47 : f32 to vector<4x8x32xf32>
      %c0_48 = arith.constant 0 : index
      %c0_49 = arith.constant 0 : index
      %c0_50 = arith.constant 0 : index
      %41 = vector.load %arg10[%c0_48, %c0_49, %c0_50] : memref<4x8x32xf32, #tpu.memory_space<vmem>>, vector<4x8x32xf32>
      tpu.vector_store %arg10[%c0_48, %c0_49, %c0_50], %40 {strides = array<i32>} : memref<4x8x32xf32, #tpu.memory_space<vmem>>, vector<4x8x32xf32>,
    } else {
    }
    %c0 = arith.constant 0 : index
    %c0_1 = arith.constant 0 : index
    %c0_2 = arith.constant 0 : index
    %3 = vector.load %arg7[%c0, %c0_1, %c0_2] : memref<4x8x32xf32, #tpu.memory_space<vmem>>, vector<4x8x32xf32>
    %c0_3 = arith.constant 0 : index
    %c0_4 = arith.constant 0 : index
    %c0_5 = arith.constant 0 : index
    %4 = vector.load %arg4[%c0_3, %c0_4, %c0_5] : memref<4x8x32xf32, #tpu.memory_space<vmem>>, vector<4x8x32xf32>
    "tpu.trace_start"() <{level = 10 : i32, message = "hqd,hkd->hqk"}> : () -> ()
    %cst = arith.constant dense<0.000000e+00> : vector<4x8x8xf32>
    %5 = tpu.matmul %3, %4, %cst {dimension_numbers = #tpu.dot_dimension_numbers<[2], [2], [1], [1], [0, 0, 0, 1, 1, 1], [0], [0]>} : vector<4x8x32xf32>, vector<4x8x32xf32>, vector<4x8x8xf32> -> vector<4x8x8xf32>
    "tpu.trace_stop"() : () -> ()
    %c0_6 = arith.constant 0 : index
    %c0_7 = arith.constant 0 : index
    %c0_8 = arith.constant 0 : index
    %6 = vector.load %arg8[%c0_6, %c0_7, %c0_8] : memref<4x8x1xf32, #tpu.memory_space<vmem>>, vector<4x8x1xf32>
    %cst_9 = arith.constant dense<0xFF800000> : vector<4x8xf32>
    %7 = vector.multi_reduction <maximumf>, %5, %cst_9 [2] : vector<4x8x8xf32> to vector<4x8xf32>
    %8 = vector.shape_cast %7 : vector<4x8xf32> to vector<4x8x1xf32>
    %9 = arith.maximumf %6, %8 : vector<4x8x1xf32>
    %10 = arith.subf %6, %9 : vector<4x8x1xf32>
    %11 = math.exp %10 : vector<4x8x1xf32>
    %12 = vector.broadcast %9 : vector<4x8x1xf32> to vector<4x8x8xf32>
    %13 = arith.subf %5, %12 : vector<4x8x8xf32>
    %14 = math.exp %13 : vector<4x8x8xf32>
    %c0_10 = arith.constant 0 : index
    %c0_11 = arith.constant 0 : index
    %c0_12 = arith.constant 0 : index
    %15 = vector.load %arg9[%c0_10, %c0_11, %c0_12] : memref<4x8x1xf32, #tpu.memory_space<vmem>>, vector<4x8x1xf32>
    %16 = arith.mulf %11, %15 : vector<4x8x1xf32>
    %cst_13 = arith.constant dense<0.000000e+00> : vector<4x8xf32>
    %17 = vector.multi_reduction <add>, %14, %cst_13 [2] : vector<4x8x8xf32> to vector<4x8xf32>
    %18 = vector.shape_cast %17 : vector<4x8xf32> to vector<4x8x1xf32>
    %19 = arith.addf %16, %18 : vector<4x8x1xf32>
    %c0_14 = arith.constant 0 : index
    %c0_15 = arith.constant 0 : index
    %c0_16 = arith.constant 0 : index
    %20 = vector.load %arg9[%c0_14, %c0_15, %c0_16] : memref<4x8x1xf32, #tpu.memory_space<vmem>>, vector<4x8x1xf32>
    tpu.vector_store %arg9[%c0_14, %c0_15, %c0_16], %19 {strides = array<i32>} : memref<4x8x1xf32, #tpu.memory_space<vmem>>, vector<4x8x1xf32>,
    %c0_17 = arith.constant 0 : index
    %c0_18 = arith.constant 0 : index
    %c0_19 = arith.constant 0 : index
    %21 = vector.load %arg10[%c0_17, %c0_18, %c0_19] : memref<4x8x32xf32, #tpu.memory_space<vmem>>, vector<4x8x32xf32>
    %22 = vector.broadcast %11 : vector<4x8x1xf32> to vector<4x8x32xf32>
    %23 = arith.mulf %22, %21 : vector<4x8x32xf32>
    %c0_20 = arith.constant 0 : index
    %c0_21 = arith.constant 0 : index
    %c0_22 = arith.constant 0 : index
    %24 = vector.load %arg5[%c0_20, %c0_21, %c0_22] : memref<4x8x32xf32, #tpu.memory_space<vmem>>, vector<4x8x32xf32>
    "tpu.trace_start"() <{level = 10 : i32, message = "hqk,hkd->hqd"}> : () -> ()
    %cst_23 = arith.constant dense<0.000000e+00> : vector<4x8x32xf32>
    %25 = tpu.matmul %14, %24, %cst_23 {dimension_numbers = #tpu.dot_dimension_numbers<[2], [1], [1], [2], [0, 0, 0, 1, 1, 2], [0], [0]>} : vector<4x8x8xf32>, vector<4x8x32xf32>, vector<4x8x32xf32> -> vector<4x8x32xf32>
    "tpu.trace_stop"() : () -> ()
    %26 = arith.addf %23, %25 : vector<4x8x32xf32>
    %c0_24 = arith.constant 0 : index
    %c0_25 = arith.constant 0 : index
    %c0_26 = arith.constant 0 : index
    %27 = vector.load %arg10[%c0_24, %c0_25, %c0_26] : memref<4x8x32xf32, #tpu.memory_space<vmem>>, vector<4x8x32xf32>
    tpu.vector_store %arg10[%c0_24, %c0_25, %c0_26], %26 {strides = array<i32>} : memref<4x8x32xf32, #tpu.memory_space<vmem>>, vector<4x8x32xf32>,
    %c0_27 = arith.constant 0 : index
    %c0_28 = arith.constant 0 : index
    %c0_29 = arith.constant 0 : index
    %28 = vector.load %arg8[%c0_27, %c0_28, %c0_29] : memref<4x8x1xf32, #tpu.memory_space<vmem>>, vector<4x8x1xf32>
    tpu.vector_store %arg8[%c0_27, %c0_28, %c0_29], %9 {strides = array<i32>} : memref<4x8x1xf32, #tpu.memory_space<vmem>>, vector<4x8x1xf32>,
    %c0_i32_30 = arith.constant 0 : i32
    %29 = arith.cmpi eq, %arg2, %c0_i32_30 : i32
    %30 = arith.extui %29 : i1 to i32
    %c0_i32_31 = arith.constant 0 : i32
    %31 = arith.cmpi ne, %30, %c0_i32_31 : i32
    scf.if %31 {
      %c0_32 = arith.constant 0 : index
      %c0_33 = arith.constant 0 : index
      %c0_34 = arith.constant 0 : index
      %32 = vector.load %arg9[%c0_32, %c0_33, %c0_34] : memref<4x8x1xf32, #tpu.memory_space<vmem>>, vector<4x8x1xf32>
      %33 = tpu.reciprocal %32 : vector<4x8x1xf32> -> vector<4x8x1xf32>
      %c0_35 = arith.constant 0 : index
      %c0_36 = arith.constant 0 : index
      %c0_37 = arith.constant 0 : index
      %34 = vector.load %arg10[%c0_35, %c0_36, %c0_37] : memref<4x8x32xf32, #tpu.memory_space<vmem>>, vector<4x8x32xf32>
      %35 = vector.broadcast %33 : vector<4x8x1xf32> to vector<4x8x32xf32>
      %36 = arith.mulf %34, %35 : vector<4x8x32xf32>
      %c0_38 = arith.constant 0 : index
      %c0_39 = arith.constant 0 : index
      %c0_40 = arith.constant 0 : index
      %37 = vector.load %arg6[%c0_38, %c0_39, %c0_40] : memref<4x8x32xf32, #tpu.memory_space<vmem>>, vector<4x8x32xf32>
      tpu.vector_store %arg6[%c0_38, %c0_39, %c0_40], %36 {strides = array<i32>} : memref<4x8x32xf32, #tpu.memory_space<vmem>>, vector<4x8x32xf32>,
    } else {
    }
    return
  }
  func.func @transform_0(%arg0: i32, %arg1: i32, %arg2: i32) -> (i32, i32, i32) {
    %c0_i32 = arith.constant 0 : i32
    %c0_i32_0 = arith.constant 0 : i32
    return %arg0, %arg1, %c0_i32 : i32, i32, i32
  }
  func.func @transform_1(%arg0: i32, %arg1: i32, %arg2: i32) -> (i32, i32, i32) {
    %c0_i32 = arith.constant 0 : i32
    %c0_i32_0 = arith.constant 0 : i32
    return %arg0, %arg2, %c0_i32 : i32, i32, i32
  }
  func.func @transform_2(%arg0: i32, %arg1: i32, %arg2: i32) -> (i32, i32, i32) {
    %c0_i32 = arith.constant 0 : i32
    %c0_i32_0 = arith.constant 0 : i32
    return %arg0, %arg2, %c0_i32 : i32, i32, i32
  }
  func.func @transform_3(%arg0: i32, %arg1: i32, %arg2: i32) -> (i32, i32, i32) {
    %c0_i32 = arith.constant 0 : i32
    %c0_i32_0 = arith.constant 0 : i32
    return %arg0, %arg1, %c0_i32 : i32, i32, i32
  }
}

</mosaic_0001>

<llo_original>
// kernel: tpu_custom_call.1
$region0: #{tpu_custom_call.1}
  #allocation0 [shape = 'u32[]', space=smem, size = 0x4, offset = 0x4, fixed_abs, tag = 'smem constant byte address 0x4 - core index']
  #allocation1 [shape = 'u32[144,128]{1,0:T(1,128)}', space=vmem, size = 0x12000, scoped, tag = 'internal scratch']
  #allocation2 [shape = 'f32[4,8,32]{2,1,0:T(8,128)}', space=vmem, size = 0x4000, scoped, tag = 'scratch operand']
  #allocation3 [shape = 'f32[4,8,1]{2,1,0:T(8,128)}', space=vmem, size = 0x4000, scoped, tag = 'scratch operand']
  #allocation4 [shape = 'f32[4,8,1]{2,1,0:T(8,128)}', space=vmem, size = 0x4000, scoped, tag = 'scratch operand']
  #allocation5 [shape = 'f32[4,8,32]{2,1,0:T(8,128)}', space=vmem, size = 0x4000, scoped, tag = 'scratch operand']
  %s0 = inlined_call_operand.hbm [shape: f32[8,8,32], index: 0, kind: input, shape index: {}]
  %s1 = inlined_call_operand.hbm [shape: f32[8,8,32], index: 1, kind: input, shape index: {}]
  %s2 = inlined_call_operand.hbm [shape: f32[8,8,32], index: 2, kind: input, shape index: {}]
  %s3 = inlined_call_operand.hbm [shape: f32[8,8,32], index: 3, kind: output, shape index: {}]
  %s4 = sld [smem:[#allocation0]]
  $region65: #{tpu_custom_call.1} parent=0
    _
  %s6 = ssub.s32 1, %s4
  %s7 = scalar_select 0, %s6, %s4
  $region1: #{tpu_custom_call.1} parent=0
    #allocation6 [shape = 'u8[32768]{0}', space=vmem, size = 0x8000, scoped, tag = 'input window, operand 0']
    #allocation7 [shape = 's32[2]{0}', space=sflag, size = 0x8, scoped, tag = 'scoped memory for tpu_custom_call.1']
    #allocation8 [shape = 's32[2]{0}', space=sflag, size = 0x8, scoped, tag = 'scoped memory for tpu_custom_call.1']
    #allocation9 [shape = 'u8[32768]{0}', space=vmem, size = 0x8000, scoped, tag = 'input window, operand 1']
    #allocation10 [shape = 's32[2]{0}', space=sflag, size = 0x8, scoped, tag = 'scoped memory for tpu_custom_call.1']
    #allocation11 [shape = 'u8[32768]{0}', space=vmem, size = 0x8000, scoped, tag = 'input window, operand 2']
    #allocation12 [shape = 'u8[32768]{0}', space=vmem, size = 0x8000, scoped, tag = 'output window, operand 0']
    %8 = vsyncpa [#allocation7], 0
    %s9 = scalar_lea.sflag [#allocation7], 1
    %10 = vsyncpa %s9, 0
    %11 = vsyncpa [#allocation10], 0
    %s12 = scalar_lea.sflag [#allocation10], 1
    %13 = vsyncpa %s12, 0
    %14 = vsyncpa [#allocation8], 0
    %s15 = scalar_lea.sflag [#allocation8], 1
    %16 = vsyncpa %s15, 0
    loop: start=0, step=1, limit=4
    $region2: #{tpu_custom_call.1} parent=1 // loop_pre_header
      _
    $region3: #{tpu_custom_call.1} parent=1 // loop_header
      %s18 = sphi 0, %s22
      %p19 = scmp.ge.s32.totalorder %s18, 4
      %s25 = sphi 0, %s44
      %s26 = sphi 0, %s40
      %s27 = sphi 0, %s36
      %s28 = sphi 0, %s25
      %s29 = sphi 0, %s26
      %s30 = sphi 0, %s27
      %s31 = sphi 0, %s28
      %s32 = sphi 0, %s29
      %s33 = sphi 0, %s30
      %s49 = sphi 0, %s51
      %s52 = sphi 0, %s49
      %s53 = sphi 0, %s52
      %s69 = sphi 0, %s53
      %s77 = sphi 0, %s79
      %s80 = sphi 0, %s77
      %s81 = sphi 0, %s80
      %s97 = sphi 0, %s81
      %s105 = sphi 0, %s107
      %s108 = sphi 0, %s105
      %s109 = sphi 0, %s108
      %s125 = sphi 0, %s109
      %s133 = sphi 0, %s135
      %s136 = sphi 0, %s133
      %s137 = sphi 0, %s136
      %s153 = sphi 0, %s137
    $region4: #{tpu_custom_call.1} parent=1 // loop_header_branch
      %21 = sbr.rel (%p19) target = $region8
    $region5: #{tpu_custom_call.1} parent=1 // loop_body
      %s23 = ssub.s32 %s18, 1
      %s24 = ssub.s32 %s18, 2
      %s34 = sadd.s32 1, %s27
      %p35 = scmp.ge.s32.totalorder %s34, 1
      %s36 = scalar_select %p35, 0, %s34
      %s37 = sadd.s32 1, %s26
      %s38 = scalar_select %p35, %s37, %s26
      %p39 = scmp.ge.s32.totalorder %s38, 1
      %s40 = scalar_select %p39, 0, %s38
      %s41 = sadd.s32 1, %s25
      %s42 = scalar_select %p39, %s41, %s25
      %p43 = scmp.ge.s32.totalorder %s42, 2
      %s44 = scalar_select %p43, 0, %s42
      %s45 = ssub.s32 %s25, %s44
      %s46 = ssub.s32 %s26, %s40
      %s47 = sor.u32 %s45, %s46
      %p48 = scmp.eq.s32.totalorder %s47, 0
      %s50 = sadd.s32 %s49, 1
      %s51 = scalar_select %p48, %s49, %s50
      %p54 = pneg %p48
      %p55 = scmp.eq.s32.totalorder %s18, 1
      %p56 = por %p54, %p55
      %p57 = scmp.ne.s32.totalorder %s49, %s52
      %p58 = scmp.eq.s32.totalorder %s18, 0
      %p59 = por %p57, %p58
      %p60 = scmp.ne.s32.totalorder %s49, %s52
      %p61 = scmp.eq.s32.totalorder %s23, 1
      %p62 = por %p60, %p61
      %p63 = scmp.ne.s32.totalorder %s52, %s53
      %p64 = scmp.eq.s32.totalorder %s23, 0
      %p65 = por %p63, %p64
      %p66 = scmp.ne.s32.totalorder %s52, %s53
      %p67 = scmp.eq.s32.totalorder %s24, 1
      %p68 = por %p66, %p67
      %p70 = scmp.ne.s32.totalorder %s53, %s69
      %p71 = scmp.eq.s32.totalorder %s24, 0
      %p72 = por %p70, %p71
      %s73 = ssub.s32 %s25, %s44
      %s74 = ssub.s32 %s27, %s36
      %s75 = sor.u32 %s73, %s74
      %p76 = scmp.eq.s32.totalorder %s75, 0
      %s78 = sadd.s32 %s77, 1
      %s79 = scalar_select %p76, %s77, %s78
      %p82 = pneg %p76
      %p83 = scmp.eq.s32.totalorder %s18, 1
      %p84 = por %p82, %p83
      %p85 = scmp.ne.s32.totalorder %s77, %s80
      %p86 = scmp.eq.s32.totalorder %s18, 0
      %p87 = por %p85, %p86
      %p88 = scmp.ne.s32.totalorder %s77, %s80
      %p89 = scmp.eq.s32.totalorder %s23, 1
      %p90 = por %p88, %p89
      %p91 = scmp.ne.s32.totalorder %s80, %s81
      %p92 = scmp.eq.s32.totalorder %s23, 0
      %p93 = por %p91, %p92
      %p94 = scmp.ne.s32.totalorder %s80, %s81
      %p95 = scmp.eq.s32.totalorder %s24, 1
      %p96 = por %p94, %p95
      %p98 = scmp.ne.s32.totalorder %s81, %s97
      %p99 = scmp.eq.s32.totalorder %s24, 0
      %p100 = por %p98, %p99
      %s101 = ssub.s32 %s25, %s44
      %s102 = ssub.s32 %s27, %s36
      %s103 = sor.u32 %s101, %s102
      %p104 = scmp.eq.s32.totalorder %s103, 0
      %s106 = sadd.s32 %s105, 1
      %s107 = scalar_select %p104, %s105, %s106
      %p110 = pneg %p104
      %p111 = scmp.eq.s32.totalorder %s18, 1
      %p112 = por %p110, %p111
      %p113 = scmp.ne.s32.totalorder %s105, %s108
      %p114 = scmp.eq.s32.totalorder %s18, 0
      %p115 = por %p113, %p114
      %p116 = scmp.ne.s32.totalorder %s105, %s108
      %p117 = scmp.eq.s32.totalorder %s23, 1
      %p118 = por %p116, %p117
      %p119 = scmp.ne.s32.totalorder %s108, %s109
      %p120 = scmp.eq.s32.totalorder %s23, 0
      %p121 = por %p119, %p120
      %p122 = scmp.ne.s32.totalorder %s108, %s109
      %p123 = scmp.eq.s32.totalorder %s24, 1
      %p124 = por %p122, %p123
      %p126 = scmp.ne.s32.totalorder %s109, %s125
      %p127 = scmp.eq.s32.totalorder %s24, 0
      %p128 = por %p126, %p127
      %s129 = ssub.s32 %s25, %s44
      %s130 = ssub.s32 %s26, %s40
      %s131 = sor.u32 %s129, %s130
      %p132 = scmp.eq.s32.totalorder %s131, 0
      %s134 = sadd.s32 %s133, 1
      %s135 = scalar_select %p132, %s133, %s134
      %p138 = pneg %p132
      %p139 = scmp.eq.s32.totalorder %s18, 1
      %p140 = por %p138, %p139
      %p141 = scmp.ne.s32.totalorder %s133, %s136
      %p142 = scmp.eq.s32.totalorder %s18, 0
      %p143 = por %p141, %p142
      %p144 = scmp.ne.s32.totalorder %s133, %s136
      %p145 = scmp.eq.s32.totalorder %s23, 1
      %p146 = por %p144, %p145
      %p147 = scmp.ne.s32.totalorder %s136, %s137
      %p148 = scmp.eq.s32.totalorder %s23, 0
      %p149 = por %p147, %p148
      %p150 = scmp.ne.s32.totalorder %s136, %s137
      %p151 = scmp.eq.s32.totalorder %s24, 1
      %p152 = por %p150, %p151
      %p154 = scmp.ne.s32.totalorder %s137, %s153
      %p155 = scmp.eq.s32.totalorder %s24, 0
      %p156 = por %p154, %p155
      %p157 = scmp.le.s32.totalorder 1, %s18
      %p158 = scmp.lt.s32.totalorder %s18, 3
      %p159 = pnand %p157, %p158
      %p160 = pneg %p159
      // Predicated region
      $region9: #{tpu_custom_call.1} parent=5 // pred_check
        _
      $region10: #{tpu_custom_call.1} parent=5 // pred_check_branch
        %162 = sbr.rel (%p159) target = $region12
      $region11: #{tpu_custom_call.1} parent=5 // pred_region
        %s163 = ssub.s32 %s18, 1
      $region12: #{tpu_custom_call.1} parent=5 // pred_fallthru
        _
      %p164 = scmp.lt.s32.totalorder %s18, 2
      // Predicated region
      $region13: #{tpu_custom_call.1} parent=5 // pred_check
        %p165 = pneg %p164
      $region14: #{tpu_custom_call.1} parent=5 // pred_check_branch
        %167 = sbr.rel (%p165) target = $region16
      $region15: #{tpu_custom_call.1} parent=5 // pred_region
        // Predicated region
        $region17: #{tpu_custom_call.1} parent=15 // pred_check
          %p168 = pneg %p59
        $region18: #{tpu_custom_call.1} parent=15 // pred_check_branch
          %170 = sbr.rel (%p168) target = $region20
        $region19: #{tpu_custom_call.1} parent=15 // pred_region
          %s171 = sand.u32 %s49, 1
          %s172 = scalar_lea.sflag [#allocation7], %s171
          %s173 = sand.u32 %s49, 1
          %s174 = smul.addr %s173, 32
          %s175 = scalar_lea.vmem [#allocation6], %s174
          %s176 = smul.u32 4, %s25
          %s178 = ssub.s32 512, 512
          %179 = vsyncadd %s172, %s178
          %s180 = sadd.s32 %s26, %s176
          %s181 = smul.addr %s180, 128
          %s182 = scalar_lea.hbm %s0, %s181
          %s183 = sshll.u32 %s175, 4
          %s184 = int_to_ptr.vmem [resolvable:$true] %s183
          %189 = dma.hbm_to_vmem [thread:$0]  %s182, 512, %s184, %s172, 128, 128, 8
        $region20: #{tpu_custom_call.1} parent=15 // pred_fallthru
          _
        // Predicated region
        $region21: #{tpu_custom_call.1} parent=15 // pred_check
          %p190 = pneg %p87
        $region22: #{tpu_custom_call.1} parent=15 // pred_check_branch
          %192 = sbr.rel (%p190) target = $region24
        $region23: #{tpu_custom_call.1} parent=15 // pred_region
          %s193 = sand.u32 %s18, 1
          %s194 = scalar_lea.sflag [#allocation10], %s193
          %s195 = sand.u32 %s77, 1
          %s196 = smul.addr %s195, 32
          %s197 = scalar_lea.vmem [#allocation9], %s196
          %s198 = smul.u32 4, %s25
          %s200 = ssub.s32 512, 512
          %201 = vsyncadd %s194, %s200
          %s202 = sadd.s32 %s27, %s198
          %s203 = smul.addr %s202, 128
          %s204 = scalar_lea.hbm %s1, %s203
          %s205 = sshll.u32 %s197, 4
          %s206 = int_to_ptr.vmem [resolvable:$true] %s205
          %211 = dma.hbm_to_vmem [thread:$0]  %s204, 512, %s206, %s194, 128, 128, 8
        $region24: #{tpu_custom_call.1} parent=15 // pred_fallthru
          _
        // Predicated region
        $region25: #{tpu_custom_call.1} parent=15 // pred_check
          %p212 = pneg %p115
        $region26: #{tpu_custom_call.1} parent=15 // pred_check_branch
          %214 = sbr.rel (%p212) target = $region28
        $region27: #{tpu_custom_call.1} parent=15 // pred_region
          %s215 = sand.u32 %s18, 1
          %s216 = scalar_lea.sflag [#allocation10], %s215
          %s217 = sand.u32 %s105, 1
          %s218 = smul.addr %s217, 32
          %s219 = scalar_lea.vmem [#allocation11], %s218
          %s220 = smul.u32 4, %s25
          %s222 = ssub.s32 512, 512
          %223 = vsyncadd %s216, %s222
          %s224 = sadd.s32 %s27, %s220
          %s225 = smul.addr %s224, 128
          %s226 = scalar_lea.hbm %s2, %s225
          %s227 = sshll.u32 %s219, 4
          %s228 = int_to_ptr.vmem [resolvable:$true] %s227
          %233 = dma.hbm_to_vmem [thread:$0]  %s226, 512, %s228, %s216, 128, 128, 8
        $region28: #{tpu_custom_call.1} parent=15 // pred_fallthru
          _
      $region16: #{tpu_custom_call.1} parent=5 // pred_fallthru
        _
      %p234 = scmp.le.s32.totalorder 1, %s18
      %p235 = scmp.lt.s32.totalorder %s18, 3
      %p236 = pnand %p234, %p235
      %p237 = pneg %p236
      // Predicated region
      $region29: #{tpu_custom_call.1} parent=5 // pred_check
        _
      $region30: #{tpu_custom_call.1} parent=5 // pred_check_branch
        %239 = sbr.rel (%p236) target = $region32
      $region31: #{tpu_custom_call.1} parent=5 // pred_region
        %s240 = ssub.s32 %s18, 1
        %s241 = sand.u32 %s52, 1
        %s242 = scalar_lea.sflag [#allocation7], %s241
        %s243 = sand.u32 %s52, 1
        %s244 = smul.addr %s243, 32
        %s245 = scalar_lea.vmem [#allocation6], %s244
        // Predicated region
        $region33: #{tpu_custom_call.1} parent=31 // pred_check
          %p246 = pneg %p65
        $region34: #{tpu_custom_call.1} parent=31 // pred_check_branch
          %248 = sbr.rel (%p246) target = $region36
        $region35: #{tpu_custom_call.1} parent=31 // pred_region
          %249 = dma.done %s242, 512
        $region36: #{tpu_custom_call.1} parent=31 // pred_fallthru
          _
        %s250 = sand.u32 %s23, 1
        %s251 = scalar_lea.sflag [#allocation10], %s250
        %s252 = sand.u32 %s80, 1
        %s253 = smul.addr %s252, 32
        %s254 = scalar_lea.vmem [#allocation9], %s253
        // Predicated region
        $region37: #{tpu_custom_call.1} parent=31 // pred_check
          %p255 = pneg %p93
        $region38: #{tpu_custom_call.1} parent=31 // pred_check_branch
          %257 = sbr.rel (%p255) target = $region40
        $region39: #{tpu_custom_call.1} parent=31 // pred_region
          %258 = dma.done %s251, 512
        $region40: #{tpu_custom_call.1} parent=31 // pred_fallthru
          _
        %s259 = sand.u32 %s23, 1
        %s260 = scalar_lea.sflag [#allocation10], %s259
        %s261 = sand.u32 %s108, 1
        %s262 = smul.addr %s261, 32
        %s263 = scalar_lea.vmem [#allocation11], %s262
        // Predicated region
        $region41: #{tpu_custom_call.1} parent=31 // pred_check
          %p264 = pneg %p121
        $region42: #{tpu_custom_call.1} parent=31 // pred_check_branch
          %266 = sbr.rel (%p264) target = $region44
        $region43: #{tpu_custom_call.1} parent=31 // pred_region
          %267 = dma.done %s260, 512
        $region44: #{tpu_custom_call.1} parent=31 // pred_fallthru
          _
        %s268 = sand.u32 %s52, 1
        %s269 = scalar_lea.sflag [#allocation7], %s268
        %s270 = sand.u32 %s52, 1
        %s271 = smul.addr %s270, 32
        %s272 = scalar_lea.vmem [#allocation6], %s271
        %p273 = pneg %p65
        %p274 = pneg %p62
        %s275 = sand.u32 %s23, 1
        %s276 = scalar_lea.sflag [#allocation10], %s275
        %s277 = sand.u32 %s80, 1
        %s278 = smul.addr %s277, 32
        %s279 = scalar_lea.vmem [#allocation9], %s278
        %p280 = pneg %p93
        %p281 = pneg %p90
        %s282 = sand.u32 %s23, 1
        %s283 = scalar_lea.sflag [#allocation10], %s282
        %s284 = sand.u32 %s108, 1
        %s285 = smul.addr %s284, 32
        %s286 = scalar_lea.vmem [#allocation11], %s285
        %p287 = pneg %p121
        %p288 = pneg %p118
        %p289 = pneg %p149
        %p290 = pneg %p146
        %s291 = sand.u32 %s136, 1
        %s292 = scalar_lea.sflag [#allocation8], %s291
        %s293 = sand.u32 %s136, 1
        %s294 = smul.addr %s293, 32
        %s295 = scalar_lea.vmem [#allocation12], %s294
        %s296 = smul.u32 4, %s28
        %s297 = smul.u32 4, %s28
        %s298 = smul.u32 4, %s28
        %s299 = smul.u32 4, %s28
        %p300 = scmp.eq.s32.totalorder %s30, 0
        // Predicated region
        $region45: #{tpu_custom_call.1} parent=31 // pred_check
          %p301 = pneg %p300
        $region46: #{tpu_custom_call.1} parent=31 // pred_check_branch
          %303 = sbr.rel (%p301) target = $region48
        $region47: #{tpu_custom_call.1} parent=31 // pred_region
          %v304 = vld [vmem:[%s245] sm:$0xff]
          %v305 = vld [vmem:[%s245 + $0x8] sm:$0xff]
          %v306 = vld [vmem:[%s245 + $0x10] sm:$0xff]
          %v307 = vld [vmem:[%s245 + $0x18] sm:$0xff]
          %v308 = vmul.f32 %v304, 0.17677669
          %v309 = vmul.f32 %v305, 0.17677669
          %v310 = vmul.f32 %v306, 0.17677669
          %v311 = vmul.f32 %v307, 0.17677669
          %vm312 = vcmask 261120
          %313 = vst.msk [vmem:[#allocation2] sm:$0xff] %vm312, %v308
          %314 = vst.msk [vmem:[#allocation2 + $0x8] sm:$0xff] %vm312, %v309
          %315 = vst.msk [vmem:[#allocation2 + $0x10] sm:$0xff] %vm312, %v310
          %316 = vst.msk [vmem:[#allocation2 + $0x18] sm:$0xff] %vm312, %v311
          %vm317 = vcmask 7168
          %318 = vst.msk [vmem:[#allocation3] sm:$0xff] %vm317, -inf
          %319 = vst.msk [vmem:[#allocation3 + $0x8] sm:$0xff] %vm317, -inf
          %320 = vst.msk [vmem:[#allocation3 + $0x10] sm:$0xff] %vm317, -inf
          %321 = vst.msk [vmem:[#allocation3 + $0x18] sm:$0xff] %vm317, -inf
          %322 = vst.msk [vmem:[#allocation4] sm:$0xff] %vm317, 0.0
          %323 = vst.msk [vmem:[#allocation4 + $0x8] sm:$0xff] %vm317, 0.0
          %324 = vst.msk [vmem:[#allocation4 + $0x10] sm:$0xff] %vm317, 0.0
          %325 = vst.msk [vmem:[#allocation4 + $0x18] sm:$0xff] %vm317, 0.0
          %326 = vst.msk [vmem:[#allocation5] sm:$0xff] %vm312, 0.0
          %327 = vst.msk [vmem:[#allocation5 + $0x8] sm:$0xff] %vm312, 0.0
          %328 = vst.msk [vmem:[#allocation5 + $0x10] sm:$0xff] %vm312, 0.0
          %329 = vst.msk [vmem:[#allocation5 + $0x18] sm:$0xff] %vm312, 0.0
        $region48: #{tpu_custom_call.1} parent=31 // pred_fallthru
          _
        %v330 = vld [vmem:[#allocation2] sm:$0xff]
        %v331 = vld [vmem:[#allocation2 + $0x8] sm:$0xff]
        %v332 = vld [vmem:[#allocation2 + $0x10] sm:$0xff]
        %v333 = vld [vmem:[#allocation2 + $0x18] sm:$0xff]
        %v334 = vld [vmem:[%s254] sm:$0xff]
        %v335 = vld [vmem:[%s254 + $0x8] sm:$0xff]
        %v336 = vld [vmem:[%s254 + $0x10] sm:$0xff]
        %v337 = vld [vmem:[%s254 + $0x18] sm:$0xff]
        %vm338 = vcmask 261120
        %v340 = vsel %vm338, %v330, 0
        %v343 = vsel %vm338, %v334, 0
        %345 = vmatprep.subr.mxu0 0.0
        %346 = vmatpush1.xpose.msra.mxu0 0.0
        %347 = vmatprep.subr.mxu0 0.0
        %348 = vmatpush1.xpose.msra.mxu0 0.0
        %349 = vmatprep.subr.mxu0 0.0
        %350 = vmatpush1.xpose.msra.mxu0 0.0
        %351 = vmatprep.subr.mxu0 0.0
        %352 = vmatpush1.xpose.msra.mxu0 0.0
        %353 = vmatprep.subr.mxu0 0.0
        %354 = vmatpush1.xpose.msra.mxu0 0.0
        %355 = vmatprep.subr.mxu0 0.0
        %356 = vmatpush1.xpose.msra.mxu0 0.0
        %357 = vmatprep.subr.mxu0 0.0
        %358 = vmatpush1.xpose.msra.mxu0 0.0
        %359 = vmatprep.subr.mxu0 0.0
        %360 = vmatpush1.xpose.msra.mxu0 0.0
        %361 = vmatprep.subr.mxu0 0.0
        %362 = vmatpush1.xpose.msra.mxu0 0.0
        %363 = vmatprep.subr.mxu0 0.0
        %364 = vmatpush1.xpose.msra.mxu0 0.0
        %365 = vmatprep.subr.mxu0 0.0
        %366 = vmatpush1.xpose.msra.mxu0 0.0
        %367 = vmatprep.subr.mxu0 0.0
        %368 = vmatpush1.xpose.msra.mxu0 0.0
        %369 = vmatprep.subr.mxu0 0.0
        %370 = vmatpush1.xpose.msra.mxu0 0.0
        %371 = vmatprep.subr.mxu0 0.0
        %372 = vmatpush1.xpose.msra.mxu0 0.0
        %373 = vmatprep.subr.mxu0 0.0
        %374 = vmatpush1.xpose.msra.mxu0 0.0
        %375 = vmatprep.subr.mxu0 0.0
        %376 = vmatpush1.xpose.msra.mxu0 %v343
        %377 = vmatprep.subr.mxu0 0.0
        %378 = vmatpush2.xpose.msra.mxu0 0.0
        %379 = vmatprep.subr.mxu0 0.0
        %380 = vmatpush2.xpose.msra.mxu0 0.0
        %381 = vmatprep.subr.mxu0 0.0
        %382 = vmatpush2.xpose.msra.mxu0 0.0
        %383 = vmatprep.subr.mxu0 0.0
        %384 = vmatpush2.xpose.msra.mxu0 0.0
        %385 = vmatprep.subr.mxu0 0.0
        %386 = vmatpush2.xpose.msra.mxu0 0.0
        %387 = vmatprep.subr.mxu0 0.0
        %388 = vmatpush2.xpose.msra.mxu0 0.0
        %389 = vmatprep.subr.mxu0 0.0
        %390 = vmatpush2.xpose.msra.mxu0 0.0
        %391 = vmatprep.subr.mxu0 0.0
        %392 = vmatpush2.xpose.msra.mxu0 0.0
        %393 = vmatprep.subr.mxu0 0.0
        %394 = vmatpush2.xpose.msra.mxu0 0.0
        %395 = vmatprep.subr.mxu0 0.0
        %396 = vmatpush2.xpose.msra.mxu0 0.0
        %397 = vmatprep.subr.mxu0 0.0
        %398 = vmatpush2.xpose.msra.mxu0 0.0
        %399 = vmatprep.subr.mxu0 0.0
        %400 = vmatpush2.xpose.msra.mxu0 0.0
        %401 = vmatprep.subr.mxu0 0.0
        %402 = vmatpush2.xpose.msra.mxu0 0.0
        %403 = vmatprep.subr.mxu0 0.0
        %404 = vmatpush2.xpose.msra.mxu0 0.0
        %405 = vmatprep.subr.mxu0 0.0
        %406 = vmatpush2.xpose.msra.mxu0 0.0
        %407 = vmatprep.subr.mxu0 0.0
        %408 = vmatpush2.xpose.msra.mxu0 0.0
        %409 = vmatprep.mubr.f32.mxu0 0.0
        %410 = vmatmul.mubr.f32.gmra.mxu0 %v340
        %v411 = vpop.f32.mrf.mxu0
        %v412 = vadd.f32 0.0, %v411
        %v413 = vpop.f32.mrf.mxu0
        %414 = vdwg.mxu0
        %v416 = vsel %vm338, %v331, 0
        %v419 = vsel %vm338, %v335, 0
        %421 = vmatprep.subr.mxu0 0.0
        %422 = vmatpush1.xpose.msra.mxu0 0.0
        %423 = vmatprep.subr.mxu0 0.0
        %424 = vmatpush1.xpose.msra.mxu0 0.0
        %425 = vmatprep.subr.mxu0 0.0
        %426 = vmatpush1.xpose.msra.mxu0 0.0
        %427 = vmatprep.subr.mxu0 0.0
        %428 = vmatpush1.xpose.msra.mxu0 0.0
        %429 = vmatprep.subr.mxu0 0.0
        %430 = vmatpush1.xpose.msra.mxu0 0.0
        %431 = vmatprep.subr.mxu0 0.0
        %432 = vmatpush1.xpose.msra.mxu0 0.0
        %433 = vmatprep.subr.mxu0 0.0
        %434 = vmatpush1.xpose.msra.mxu0 0.0
        %435 = vmatprep.subr.mxu0 0.0
        %436 = vmatpush1.xpose.msra.mxu0 0.0
        %437 = vmatprep.subr.mxu0 0.0
        %438 = vmatpush1.xpose.msra.mxu0 0.0
        %439 = vmatprep.subr.mxu0 0.0
        %440 = vmatpush1.xpose.msra.mxu0 0.0
        %441 = vmatprep.subr.mxu0 0.0
        %442 = vmatpush1.xpose.msra.mxu0 0.0
        %443 = vmatprep.subr.mxu0 0.0
        %444 = vmatpush1.xpose.msra.mxu0 0.0
        %445 = vmatprep.subr.mxu0 0.0
        %446 = vmatpush1.xpose.msra.mxu0 0.0
        %447 = vmatprep.subr.mxu0 0.0
        %448 = vmatpush1.xpose.msra.mxu0 0.0
        %449 = vmatprep.subr.mxu0 0.0
        %450 = vmatpush1.xpose.msra.mxu0 0.0
        %451 = vmatprep.subr.mxu0 0.0
        %452 = vmatpush1.xpose.msra.mxu0 %v419
        %453 = vmatprep.subr.mxu0 0.0
        %454 = vmatpush2.xpose.msra.mxu0 0.0
        %455 = vmatprep.subr.mxu0 0.0
        %456 = vmatpush2.xpose.msra.mxu0 0.0
        %457 = vmatprep.subr.mxu0 0.0
        %458 = vmatpush2.xpose.msra.mxu0 0.0
        %459 = vmatprep.subr.mxu0 0.0
        %460 = vmatpush2.xpose.msra.mxu0 0.0
        %461 = vmatprep.subr.mxu0 0.0
        %462 = vmatpush2.xpose.msra.mxu0 0.0
        %463 = vmatprep.subr.mxu0 0.0
        %464 = vmatpush2.xpose.msra.mxu0 0.0
        %465 = vmatprep.subr.mxu0 0.0
        %466 = vmatpush2.xpose.msra.mxu0 0.0
        %467 = vmatprep.subr.mxu0 0.0
        %468 = vmatpush2.xpose.msra.mxu0 0.0
        %469 = vmatprep.subr.mxu0 0.0
        %470 = vmatpush2.xpose.msra.mxu0 0.0
        %471 = vmatprep.subr.mxu0 0.0
        %472 = vmatpush2.xpose.msra.mxu0 0.0
        %473 = vmatprep.subr.mxu0 0.0
        %474 = vmatpush2.xpose.msra.mxu0 0.0
        %475 = vmatprep.subr.mxu0 0.0
        %476 = vmatpush2.xpose.msra.mxu0 0.0
        %477 = vmatprep.subr.mxu0 0.0
        %478 = vmatpush2.xpose.msra.mxu0 0.0
        %479 = vmatprep.subr.mxu0 0.0
        %480 = vmatpush2.xpose.msra.mxu0 0.0
        %481 = vmatprep.subr.mxu0 0.0
        %482 = vmatpush2.xpose.msra.mxu0 0.0
        %483 = vmatprep.subr.mxu0 0.0
        %484 = vmatpush2.xpose.msra.mxu0 0.0
        %485 = vmatprep.mubr.f32.mxu0 0.0
        %486 = vmatmul.mubr.f32.gmra.mxu0 %v416
        %v487 = vpop.f32.mrf.mxu0
        %v488 = vadd.f32 0.0, %v487
        %v489 = vpop.f32.mrf.mxu0
        %490 = vdwg.mxu0
        %v492 = vsel %vm338, %v332, 0
        %v495 = vsel %vm338, %v336, 0
        %497 = vmatprep.subr.mxu0 0.0
        %498 = vmatpush1.xpose.msra.mxu0 0.0
        %499 = vmatprep.subr.mxu0 0.0
        %500 = vmatpush1.xpose.msra.mxu0 0.0
        %501 = vmatprep.subr.mxu0 0.0
        %502 = vmatpush1.xpose.msra.mxu0 0.0
        %503 = vmatprep.subr.mxu0 0.0
        %504 = vmatpush1.xpose.msra.mxu0 0.0
        %505 = vmatprep.subr.mxu0 0.0
        %506 = vmatpush1.xpose.msra.mxu0 0.0
        %507 = vmatprep.subr.mxu0 0.0
        %508 = vmatpush1.xpose.msra.mxu0 0.0
        %509 = vmatprep.subr.mxu0 0.0
        %510 = vmatpush1.xpose.msra.mxu0 0.0
        %511 = vmatprep.subr.mxu0 0.0
        %512 = vmatpush1.xpose.msra.mxu0 0.0
        %513 = vmatprep.subr.mxu0 0.0
        %514 = vmatpush1.xpose.msra.mxu0 0.0
        %515 = vmatprep.subr.mxu0 0.0
        %516 = vmatpush1.xpose.msra.mxu0 0.0
        %517 = vmatprep.subr.mxu0 0.0
        %518 = vmatpush1.xpose.msra.mxu0 0.0
        %519 = vmatprep.subr.mxu0 0.0
        %520 = vmatpush1.xpose.msra.mxu0 0.0
        %521 = vmatprep.subr.mxu0 0.0
        %522 = vmatpush1.xpose.msra.mxu0 0.0
        %523 = vmatprep.subr.mxu0 0.0
        %524 = vmatpush1.xpose.msra.mxu0 0.0
        %525 = vmatprep.subr.mxu0 0.0
        %526 = vmatpush1.xpose.msra.mxu0 0.0
        %527 = vmatprep.subr.mxu0 0.0
        %528 = vmatpush1.xpose.msra.mxu0 %v495
        %529 = vmatprep.subr.mxu0 0.0
        %530 = vmatpush2.xpose.msra.mxu0 0.0
        %531 = vmatprep.subr.mxu0 0.0
        %532 = vmatpush2.xpose.msra.mxu0 0.0
        %533 = vmatprep.subr.mxu0 0.0
        %534 = vmatpush2.xpose.msra.mxu0 0.0
        %535 = vmatprep.subr.mxu0 0.0
        %536 = vmatpush2.xpose.msra.mxu0 0.0
        %537 = vmatprep.subr.mxu0 0.0
        %538 = vmatpush2.xpose.msra.mxu0 0.0
        %539 = vmatprep.subr.mxu0 0.0
        %540 = vmatpush2.xpose.msra.mxu0 0.0
        %541 = vmatprep.subr.mxu0 0.0
        %542 = vmatpush2.xpose.msra.mxu0 0.0
        %543 = vmatprep.subr.mxu0 0.0
        %544 = vmatpush2.xpose.msra.mxu0 0.0
        %545 = vmatprep.subr.mxu0 0.0
        %546 = vmatpush2.xpose.msra.mxu0 0.0
        %547 = vmatprep.subr.mxu0 0.0
        %548 = vmatpush2.xpose.msra.mxu0 0.0
        %549 = vmatprep.subr.mxu0 0.0
        %550 = vmatpush2.xpose.msra.mxu0 0.0
        %551 = vmatprep.subr.mxu0 0.0
        %552 = vmatpush2.xpose.msra.mxu0 0.0
        %553 = vmatprep.subr.mxu0 0.0
        %554 = vmatpush2.xpose.msra.mxu0 0.0
        %555 = vmatprep.subr.mxu0 0.0
        %556 = vmatpush2.xpose.msra.mxu0 0.0
        %557 = vmatprep.subr.mxu0 0.0
        %558 = vmatpush2.xpose.msra.mxu0 0.0
        %559 = vmatprep.subr.mxu0 0.0
        %560 = vmatpush2.xpose.msra.mxu0 0.0
        %561 = vmatprep.mubr.f32.mxu0 0.0
        %562 = vmatmul.mubr.f32.gmra.mxu0 %v492
        %v563 = vpop.f32.mrf.mxu0
        %v564 = vadd.f32 0.0, %v563
        %v565 = vpop.f32.mrf.mxu0
        %566 = vdwg.mxu0
        %v568 = vsel %vm338, %v333, 0
        %v571 = vsel %vm338, %v337, 0
        %573 = vmatprep.subr.mxu0 0.0
        %574 = vmatpush1.xpose.msra.mxu0 0.0
        %575 = vmatprep.subr.mxu0 0.0
        %576 = vmatpush1.xpose.msra.mxu0 0.0
        %577 = vmatprep.subr.mxu0 0.0
        %578 = vmatpush1.xpose.msra.mxu0 0.0
        %579 = vmatprep.subr.mxu0 0.0
        %580 = vmatpush1.xpose.msra.mxu0 0.0
        %581 = vmatprep.subr.mxu0 0.0
        %582 = vmatpush1.xpose.msra.mxu0 0.0
        %583 = vmatprep.subr.mxu0 0.0
        %584 = vmatpush1.xpose.msra.mxu0 0.0
        %585 = vmatprep.subr.mxu0 0.0
        %586 = vmatpush1.xpose.msra.mxu0 0.0
        %587 = vmatprep.subr.mxu0 0.0
        %588 = vmatpush1.xpose.msra.mxu0 0.0
        %589 = vmatprep.subr.mxu0 0.0
        %590 = vmatpush1.xpose.msra.mxu0 0.0
        %591 = vmatprep.subr.mxu0 0.0
        %592 = vmatpush1.xpose.msra.mxu0 0.0
        %593 = vmatprep.subr.mxu0 0.0
        %594 = vmatpush1.xpose.msra.mxu0 0.0
        %595 = vmatprep.subr.mxu0 0.0
        %596 = vmatpush1.xpose.msra.mxu0 0.0
        %597 = vmatprep.subr.mxu0 0.0
        %598 = vmatpush1.xpose.msra.mxu0 0.0
        %599 = vmatprep.subr.mxu0 0.0
        %600 = vmatpush1.xpose.msra.mxu0 0.0
        %601 = vmatprep.subr.mxu0 0.0
        %602 = vmatpush1.xpose.msra.mxu0 0.0
        %603 = vmatprep.subr.mxu0 0.0
        %604 = vmatpush1.xpose.msra.mxu0 %v571
        %605 = vmatprep.subr.mxu0 0.0
        %606 = vmatpush2.xpose.msra.mxu0 0.0
        %607 = vmatprep.subr.mxu0 0.0
        %608 = vmatpush2.xpose.msra.mxu0 0.0
        %609 = vmatprep.subr.mxu0 0.0
        %610 = vmatpush2.xpose.msra.mxu0 0.0
        %611 = vmatprep.subr.mxu0 0.0
        %612 = vmatpush2.xpose.msra.mxu0 0.0
        %613 = vmatprep.subr.mxu0 0.0
        %614 = vmatpush2.xpose.msra.mxu0 0.0
        %615 = vmatprep.subr.mxu0 0.0
        %616 = vmatpush2.xpose.msra.mxu0 0.0
        %617 = vmatprep.subr.mxu0 0.0
        %618 = vmatpush2.xpose.msra.mxu0 0.0
        %619 = vmatprep.subr.mxu0 0.0
        %620 = vmatpush2.xpose.msra.mxu0 0.0
        %621 = vmatprep.subr.mxu0 0.0
        %622 = vmatpush2.xpose.msra.mxu0 0.0
        %623 = vmatprep.subr.mxu0 0.0
        %624 = vmatpush2.xpose.msra.mxu0 0.0
        %625 = vmatprep.subr.mxu0 0.0
        %626 = vmatpush2.xpose.msra.mxu0 0.0
        %627 = vmatprep.subr.mxu0 0.0
        %628 = vmatpush2.xpose.msra.mxu0 0.0
        %629 = vmatprep.subr.mxu0 0.0
        %630 = vmatpush2.xpose.msra.mxu0 0.0
        %631 = vmatprep.subr.mxu0 0.0
        %632 = vmatpush2.xpose.msra.mxu0 0.0
        %633 = vmatprep.subr.mxu0 0.0
        %634 = vmatpush2.xpose.msra.mxu0 0.0
        %635 = vmatprep.subr.mxu0 0.0
        %636 = vmatpush2.xpose.msra.mxu0 0.0
        %637 = vmatprep.mubr.f32.mxu0 0.0
        %638 = vmatmul.mubr.f32.gmra.mxu0 %v568
        %v639 = vpop.f32.mrf.mxu0
        %v640 = vadd.f32 0.0, %v639
        %v641 = vpop.f32.mrf.mxu0
        %642 = vdwg.mxu0
        %v643 = vld [vmem:[#allocation3] sm:$0xff]
        %v644 = vld [vmem:[#allocation3 + $0x8] sm:$0xff]
        %v645 = vld [vmem:[#allocation3 + $0x10] sm:$0xff]
        %v646 = vld [vmem:[#allocation3 + $0x18] sm:$0xff]
        %vm647 = vcmask 64512
        %v648 = vsel %vm647, %v412, -inf
        %649 = vmax.xlane.f32.xlu0 %v648
        %v650 = vpop.xlane.xlu0 %649
        %v651 = vsel %vm647, %v488, -inf
        %652 = vmax.xlane.f32.xlu0 %v651
        %v653 = vpop.xlane.xlu0 %652
        %v654 = vsel %vm647, %v564, -inf
        %655 = vmax.xlane.f32.xlu0 %v654
        %v656 = vpop.xlane.xlu0 %655
        %v657 = vsel %vm647, %v640, -inf
        %658 = vmax.xlane.f32.xlu0 %v657
        %v659 = vpop.xlane.xlu0 %658
        %v660 = vmax.f32 %v643, %v650
        %v661 = vmax.f32 %v644, %v653
        %v662 = vmax.f32 %v645, %v656
        %v663 = vmax.f32 %v646, %v659
        %v664 = vsub.f32 %v643, %v660
        %v665 = vsub.f32 %v644, %v661
        %v666 = vsub.f32 %v645, %v662
        %v667 = vsub.f32 %v646, %v663
        %v668 = vmul.f32 %v664, 1.442695
        %v669 = vpow.pop %v668
        %v670 = vmul.f32 %v665, 1.442695
        %v671 = vpow.pop %v670
        %v672 = vmul.f32 %v666, 1.442695
        %v673 = vpow.pop %v672
        %v674 = vmul.f32 %v667, 1.442695
        %v675 = vpow.pop %v674
        %677 = vset.pattern.permute.xlu0 0
        %678 = vperm.xlu0 %677, %v660
        %v679 = vpop.permute.xlu0 %678
        %682 = vset.pattern.permute.xlu0 0
        %683 = vperm.xlu0 %682, %v661
        %v684 = vpop.permute.xlu0 %683
        %687 = vset.pattern.permute.xlu0 0
        %688 = vperm.xlu0 %687, %v662
        %v689 = vpop.permute.xlu0 %688
        %692 = vset.pattern.permute.xlu0 0
        %693 = vperm.xlu0 %692, %v663
        %v694 = vpop.permute.xlu0 %693
        %v696 = vsub.f32 %v412, %v679
        %v697 = vsub.f32 %v488, %v684
        %v698 = vsub.f32 %v564, %v689
        %v699 = vsub.f32 %v640, %v694
        %v700 = vmul.f32 %v696, 1.442695
        %v701 = vpow.pop %v700
        %v702 = vmul.f32 %v697, 1.442695
        %v703 = vpow.pop %v702
        %v704 = vmul.f32 %v698, 1.442695
        %v705 = vpow.pop %v704
        %v706 = vmul.f32 %v699, 1.442695
        %v707 = vpow.pop %v706
        %v708 = vld [vmem:[#allocation4] sm:$0xff]
        %v709 = vld [vmem:[#allocation4 + $0x8] sm:$0xff]
        %v710 = vld [vmem:[#allocation4 + $0x10] sm:$0xff]
        %v711 = vld [vmem:[#allocation4 + $0x18] sm:$0xff]
        %v712 = vmul.f32 %v669, %v708
        %v713 = vmul.f32 %v671, %v709
        %v714 = vmul.f32 %v673, %v710
        %v715 = vmul.f32 %v675, %v711
        %v716 = vsel %vm647, %v701, 0.0
        %717 = vadd.xlane.f32.xlu0 %v716
        %v718 = vpop.xlane.xlu0 %717
        %v719 = vsel %vm647, %v703, 0.0
        %720 = vadd.xlane.f32.xlu0 %v719
        %v721 = vpop.xlane.xlu0 %720
        %v722 = vsel %vm647, %v705, 0.0
        %723 = vadd.xlane.f32.xlu0 %v722
        %v724 = vpop.xlane.xlu0 %723
        %v725 = vsel %vm647, %v707, 0.0
        %726 = vadd.xlane.f32.xlu0 %v725
        %v727 = vpop.xlane.xlu0 %726
        %v728 = vadd.f32 %v712, %v718
        %v729 = vadd.f32 %v713, %v721
        %v730 = vadd.f32 %v714, %v724
        %v731 = vadd.f32 %v715, %v727
        %vm732 = vcmask 7168
        %733 = vst.msk [vmem:[#allocation4] sm:$0xff] %vm732, %v728
        %734 = vst.msk [vmem:[#allocation4 + $0x8] sm:$0xff] %vm732, %v729
        %735 = vst.msk [vmem:[#allocation4 + $0x10] sm:$0xff] %vm732, %v730
        %736 = vst.msk [vmem:[#allocation4 + $0x18] sm:$0xff] %vm732, %v731
        %v737 = vld [vmem:[#allocation5] sm:$0xff]
        %v738 = vld [vmem:[#allocation5 + $0x8] sm:$0xff]
        %v739 = vld [vmem:[#allocation5 + $0x10] sm:$0xff]
        %v740 = vld [vmem:[#allocation5 + $0x18] sm:$0xff]
        %742 = vset.pattern.permute.xlu0 0
        %743 = vperm.xlu0 %742, %v669
        %v744 = vpop.permute.xlu0 %743
        %747 = vset.pattern.permute.xlu0 0
        %748 = vperm.xlu0 %747, %v671
        %v749 = vpop.permute.xlu0 %748
        %752 = vset.pattern.permute.xlu0 0
        %753 = vperm.xlu0 %752, %v673
        %v754 = vpop.permute.xlu0 %753
        %757 = vset.pattern.permute.xlu0 0
        %758 = vperm.xlu0 %757, %v675
        %v759 = vpop.permute.xlu0 %758
        %v761 = vmul.f32 %v744, %v737
        %v762 = vmul.f32 %v749, %v738
        %v763 = vmul.f32 %v754, %v739
        %v764 = vmul.f32 %v759, %v740
        %v765 = vld [vmem:[%s263] sm:$0xff]
        %v766 = vld [vmem:[%s263 + $0x8] sm:$0xff]
        %v767 = vld [vmem:[%s263 + $0x10] sm:$0xff]
        %v768 = vld [vmem:[%s263 + $0x18] sm:$0xff]
        %v770 = vsel %vm647, %v701, 0
        %772 = vmatprep.subr.mxu0 0.0
        %773 = vmatpush1.msra.mxu0 0.0
        %774 = vmatprep.subr.mxu0 0.0
        %775 = vmatpush1.msra.mxu0 0.0
        %776 = vmatprep.subr.mxu0 0.0
        %777 = vmatpush1.msra.mxu0 0.0
        %778 = vmatprep.subr.mxu0 0.0
        %779 = vmatpush1.msra.mxu0 0.0
        %780 = vmatprep.subr.mxu0 0.0
        %781 = vmatpush1.msra.mxu0 0.0
        %782 = vmatprep.subr.mxu0 0.0
        %783 = vmatpush1.msra.mxu0 0.0
        %784 = vmatprep.subr.mxu0 0.0
        %785 = vmatpush1.msra.mxu0 0.0
        %786 = vmatprep.subr.mxu0 0.0
        %787 = vmatpush1.msra.mxu0 0.0
        %788 = vmatprep.subr.mxu0 0.0
        %789 = vmatpush1.msra.mxu0 0.0
        %790 = vmatprep.subr.mxu0 0.0
        %791 = vmatpush1.msra.mxu0 0.0
        %792 = vmatprep.subr.mxu0 0.0
        %793 = vmatpush1.msra.mxu0 0.0
        %794 = vmatprep.subr.mxu0 0.0
        %795 = vmatpush1.msra.mxu0 0.0
        %796 = vmatprep.subr.mxu0 0.0
        %797 = vmatpush1.msra.mxu0 0.0
        %798 = vmatprep.subr.mxu0 0.0
        %799 = vmatpush1.msra.mxu0 0.0
        %800 = vmatprep.subr.mxu0 0.0
        %801 = vmatpush1.msra.mxu0 0.0
        %802 = vmatprep.subr.mxu0 0.0
        %803 = vmatpush1.msra.mxu0 %v765
        %804 = vmatprep.subr.mxu0 0.0
        %805 = vmatpush2.msra.mxu0 0.0
        %806 = vmatprep.subr.mxu0 0.0
        %807 = vmatpush2.msra.mxu0 0.0
        %808 = vmatprep.subr.mxu0 0.0
        %809 = vmatpush2.msra.mxu0 0.0
        %810 = vmatprep.subr.mxu0 0.0
        %811 = vmatpush2.msra.mxu0 0.0
        %812 = vmatprep.subr.mxu0 0.0
        %813 = vmatpush2.msra.mxu0 0.0
        %814 = vmatprep.subr.mxu0 0.0
        %815 = vmatpush2.msra.mxu0 0.0
        %816 = vmatprep.subr.mxu0 0.0
        %817 = vmatpush2.msra.mxu0 0.0
        %818 = vmatprep.subr.mxu0 0.0
        %819 = vmatpush2.msra.mxu0 0.0
        %820 = vmatprep.subr.mxu0 0.0
        %821 = vmatpush2.msra.mxu0 0.0
        %822 = vmatprep.subr.mxu0 0.0
        %823 = vmatpush2.msra.mxu0 0.0
        %824 = vmatprep.subr.mxu0 0.0
        %825 = vmatpush2.msra.mxu0 0.0
        %826 = vmatprep.subr.mxu0 0.0
        %827 = vmatpush2.msra.mxu0 0.0
        %828 = vmatprep.subr.mxu0 0.0
        %829 = vmatpush2.msra.mxu0 0.0
        %830 = vmatprep.subr.mxu0 0.0
        %831 = vmatpush2.msra.mxu0 0.0
        %832 = vmatprep.subr.mxu0 0.0
        %833 = vmatpush2.msra.mxu0 0.0
        %834 = vmatprep.subr.mxu0 0.0
        %835 = vmatpush2.msra.mxu0 0.0
        %836 = vmatprep.mubr.f32.mxu0 0.0
        %837 = vmatmul.mubr.f32.gmra.mxu0 %v770
        %v838 = vpop.f32.mrf.mxu0
        %v839 = vadd.f32 0.0, %v838
        %v840 = vpop.f32.mrf.mxu0
        %841 = vdwg.mxu0
        %v843 = vsel %vm647, %v703, 0
        %845 = vmatprep.subr.mxu0 0.0
        %846 = vmatpush1.msra.mxu0 0.0
        %847 = vmatprep.subr.mxu0 0.0
        %848 = vmatpush1.msra.mxu0 0.0
        %849 = vmatprep.subr.mxu0 0.0
        %850 = vmatpush1.msra.mxu0 0.0
        %851 = vmatprep.subr.mxu0 0.0
        %852 = vmatpush1.msra.mxu0 0.0
        %853 = vmatprep.subr.mxu0 0.0
        %854 = vmatpush1.msra.mxu0 0.0
        %855 = vmatprep.subr.mxu0 0.0
        %856 = vmatpush1.msra.mxu0 0.0
        %857 = vmatprep.subr.mxu0 0.0
        %858 = vmatpush1.msra.mxu0 0.0
        %859 = vmatprep.subr.mxu0 0.0
        %860 = vmatpush1.msra.mxu0 0.0
        %861 = vmatprep.subr.mxu0 0.0
        %862 = vmatpush1.msra.mxu0 0.0
        %863 = vmatprep.subr.mxu0 0.0
        %864 = vmatpush1.msra.mxu0 0.0
        %865 = vmatprep.subr.mxu0 0.0
        %866 = vmatpush1.msra.mxu0 0.0
        %867 = vmatprep.subr.mxu0 0.0
        %868 = vmatpush1.msra.mxu0 0.0
        %869 = vmatprep.subr.mxu0 0.0
        %870 = vmatpush1.msra.mxu0 0.0
        %871 = vmatprep.subr.mxu0 0.0
        %872 = vmatpush1.msra.mxu0 0.0
        %873 = vmatprep.subr.mxu0 0.0
        %874 = vmatpush1.msra.mxu0 0.0
        %875 = vmatprep.subr.mxu0 0.0
        %876 = vmatpush1.msra.mxu0 %v766
        %877 = vmatprep.subr.mxu0 0.0
        %878 = vmatpush2.msra.mxu0 0.0
        %879 = vmatprep.subr.mxu0 0.0
        %880 = vmatpush2.msra.mxu0 0.0
        %881 = vmatprep.subr.mxu0 0.0
        %882 = vmatpush2.msra.mxu0 0.0
        %883 = vmatprep.subr.mxu0 0.0
        %884 = vmatpush2.msra.mxu0 0.0
        %885 = vmatprep.subr.mxu0 0.0
        %886 = vmatpush2.msra.mxu0 0.0
        %887 = vmatprep.subr.mxu0 0.0
        %888 = vmatpush2.msra.mxu0 0.0
        %889 = vmatprep.subr.mxu0 0.0
        %890 = vmatpush2.msra.mxu0 0.0
        %891 = vmatprep.subr.mxu0 0.0
        %892 = vmatpush2.msra.mxu0 0.0
        %893 = vmatprep.subr.mxu0 0.0
        %894 = vmatpush2.msra.mxu0 0.0
        %895 = vmatprep.subr.mxu0 0.0
        %896 = vmatpush2.msra.mxu0 0.0
        %897 = vmatprep.subr.mxu0 0.0
        %898 = vmatpush2.msra.mxu0 0.0
        %899 = vmatprep.subr.mxu0 0.0
        %900 = vmatpush2.msra.mxu0 0.0
        %901 = vmatprep.subr.mxu0 0.0
        %902 = vmatpush2.msra.mxu0 0.0
        %903 = vmatprep.subr.mxu0 0.0
        %904 = vmatpush2.msra.mxu0 0.0
        %905 = vmatprep.subr.mxu0 0.0
        %906 = vmatpush2.msra.mxu0 0.0
        %907 = vmatprep.subr.mxu0 0.0
        %908 = vmatpush2.msra.mxu0 0.0
        %909 = vmatprep.mubr.f32.mxu0 0.0
        %910 = vmatmul.mubr.f32.gmra.mxu0 %v843
        %v911 = vpop.f32.mrf.mxu0
        %v912 = vadd.f32 0.0, %v911
        %v913 = vpop.f32.mrf.mxu0
        %914 = vdwg.mxu0
        %v916 = vsel %vm647, %v705, 0
        %918 = vmatprep.subr.mxu0 0.0
        %919 = vmatpush1.msra.mxu0 0.0
        %920 = vmatprep.subr.mxu0 0.0
        %921 = vmatpush1.msra.mxu0 0.0
        %922 = vmatprep.subr.mxu0 0.0
        %923 = vmatpush1.msra.mxu0 0.0
        %924 = vmatprep.subr.mxu0 0.0
        %925 = vmatpush1.msra.mxu0 0.0
        %926 = vmatprep.subr.mxu0 0.0
        %927 = vmatpush1.msra.mxu0 0.0
        %928 = vmatprep.subr.mxu0 0.0
        %929 = vmatpush1.msra.mxu0 0.0
        %930 = vmatprep.subr.mxu0 0.0
        %931 = vmatpush1.msra.mxu0 0.0
        %932 = vmatprep.subr.mxu0 0.0
        %933 = vmatpush1.msra.mxu0 0.0
        %934 = vmatprep.subr.mxu0 0.0
        %935 = vmatpush1.msra.mxu0 0.0
        %936 = vmatprep.subr.mxu0 0.0
        %937 = vmatpush1.msra.mxu0 0.0
        %938 = vmatprep.subr.mxu0 0.0
        %939 = vmatpush1.msra.mxu0 0.0
        %940 = vmatprep.subr.mxu0 0.0
        %941 = vmatpush1.msra.mxu0 0.0
        %942 = vmatprep.subr.mxu0 0.0
        %943 = vmatpush1.msra.mxu0 0.0
        %944 = vmatprep.subr.mxu0 0.0
        %945 = vmatpush1.msra.mxu0 0.0
        %946 = vmatprep.subr.mxu0 0.0
        %947 = vmatpush1.msra.mxu0 0.0
        %948 = vmatprep.subr.mxu0 0.0
        %949 = vmatpush1.msra.mxu0 %v767
        %950 = vmatprep.subr.mxu0 0.0
        %951 = vmatpush2.msra.mxu0 0.0
        %952 = vmatprep.subr.mxu0 0.0
        %953 = vmatpush2.msra.mxu0 0.0
        %954 = vmatprep.subr.mxu0 0.0
        %955 = vmatpush2.msra.mxu0 0.0
        %956 = vmatprep.subr.mxu0 0.0
        %957 = vmatpush2.msra.mxu0 0.0
        %958 = vmatprep.subr.mxu0 0.0
        %959 = vmatpush2.msra.mxu0 0.0
        %960 = vmatprep.subr.mxu0 0.0
        %961 = vmatpush2.msra.mxu0 0.0
        %962 = vmatprep.subr.mxu0 0.0
        %963 = vmatpush2.msra.mxu0 0.0
        %964 = vmatprep.subr.mxu0 0.0
        %965 = vmatpush2.msra.mxu0 0.0
        %966 = vmatprep.subr.mxu0 0.0
        %967 = vmatpush2.msra.mxu0 0.0
        %968 = vmatprep.subr.mxu0 0.0
        %969 = vmatpush2.msra.mxu0 0.0
        %970 = vmatprep.subr.mxu0 0.0
        %971 = vmatpush2.msra.mxu0 0.0
        %972 = vmatprep.subr.mxu0 0.0
        %973 = vmatpush2.msra.mxu0 0.0
        %974 = vmatprep.subr.mxu0 0.0
        %975 = vmatpush2.msra.mxu0 0.0
        %976 = vmatprep.subr.mxu0 0.0
        %977 = vmatpush2.msra.mxu0 0.0
        %978 = vmatprep.subr.mxu0 0.0
        %979 = vmatpush2.msra.mxu0 0.0
        %980 = vmatprep.subr.mxu0 0.0
        %981 = vmatpush2.msra.mxu0 0.0
        %982 = vmatprep.mubr.f32.mxu0 0.0
        %983 = vmatmul.mubr.f32.gmra.mxu0 %v916
        %v984 = vpop.f32.mrf.mxu0
        %v985 = vadd.f32 0.0, %v984
        %v986 = vpop.f32.mrf.mxu0
        %987 = vdwg.mxu0
        %v989 = vsel %vm647, %v707, 0
        %991 = vmatprep.subr.mxu0 0.0
        %992 = vmatpush1.msra.mxu0 0.0
        %993 = vmatprep.subr.mxu0 0.0
        %994 = vmatpush1.msra.mxu0 0.0
        %995 = vmatprep.subr.mxu0 0.0
        %996 = vmatpush1.msra.mxu0 0.0
        %997 = vmatprep.subr.mxu0 0.0
        %998 = vmatpush1.msra.mxu0 0.0
        %999 = vmatprep.subr.mxu0 0.0
        %1000 = vmatpush1.msra.mxu0 0.0
        %1001 = vmatprep.subr.mxu0 0.0
        %1002 = vmatpush1.msra.mxu0 0.0
        %1003 = vmatprep.subr.mxu0 0.0
        %1004 = vmatpush1.msra.mxu0 0.0
        %1005 = vmatprep.subr.mxu0 0.0
        %1006 = vmatpush1.msra.mxu0 0.0
        %1007 = vmatprep.subr.mxu0 0.0
        %1008 = vmatpush1.msra.mxu0 0.0
        %1009 = vmatprep.subr.mxu0 0.0
        %1010 = vmatpush1.msra.mxu0 0.0
        %1011 = vmatprep.subr.mxu0 0.0
        %1012 = vmatpush1.msra.mxu0 0.0
        %1013 = vmatprep.subr.mxu0 0.0
        %1014 = vmatpush1.msra.mxu0 0.0
        %1015 = vmatprep.subr.mxu0 0.0
        %1016 = vmatpush1.msra.mxu0 0.0
        %1017 = vmatprep.subr.mxu0 0.0
        %1018 = vmatpush1.msra.mxu0 0.0
        %1019 = vmatprep.subr.mxu0 0.0
        %1020 = vmatpush1.msra.mxu0 0.0
        %1021 = vmatprep.subr.mxu0 0.0
        %1022 = vmatpush1.msra.mxu0 %v768
        %1023 = vmatprep.subr.mxu0 0.0
        %1024 = vmatpush2.msra.mxu0 0.0
        %1025 = vmatprep.subr.mxu0 0.0
        %1026 = vmatpush2.msra.mxu0 0.0
        %1027 = vmatprep.subr.mxu0 0.0
        %1028 = vmatpush2.msra.mxu0 0.0
        %1029 = vmatprep.subr.mxu0 0.0
        %1030 = vmatpush2.msra.mxu0 0.0
        %1031 = vmatprep.subr.mxu0 0.0
        %1032 = vmatpush2.msra.mxu0 0.0
        %1033 = vmatprep.subr.mxu0 0.0
        %1034 = vmatpush2.msra.mxu0 0.0
        %1035 = vmatprep.subr.mxu0 0.0
        %1036 = vmatpush2.msra.mxu0 0.0
        %1037 = vmatprep.subr.mxu0 0.0
        %1038 = vmatpush2.msra.mxu0 0.0
        %1039 = vmatprep.subr.mxu0 0.0
        %1040 = vmatpush2.msra.mxu0 0.0
        %1041 = vmatprep.subr.mxu0 0.0
        %1042 = vmatpush2.msra.mxu0 0.0
        %1043 = vmatprep.subr.mxu0 0.0
        %1044 = vmatpush2.msra.mxu0 0.0
        %1045 = vmatprep.subr.mxu0 0.0
        %1046 = vmatpush2.msra.mxu0 0.0
        %1047 = vmatprep.subr.mxu0 0.0
        %1048 = vmatpush2.msra.mxu0 0.0
        %1049 = vmatprep.subr.mxu0 0.0
        %1050 = vmatpush2.msra.mxu0 0.0
        %1051 = vmatprep.subr.mxu0 0.0
        %1052 = vmatpush2.msra.mxu0 0.0
        %1053 = vmatprep.subr.mxu0 0.0
        %1054 = vmatpush2.msra.mxu0 0.0
        %1055 = vmatprep.mubr.f32.mxu0 0.0
        %1056 = vmatmul.mubr.f32.gmra.mxu0 %v989
        %v1057 = vpop.f32.mrf.mxu0
        %v1058 = vadd.f32 0.0, %v1057
        %v1059 = vpop.f32.mrf.mxu0
        %1060 = vdwg.mxu0
        %v1061 = vadd.f32 %v761, %v839
        %v1062 = vadd.f32 %v762, %v912
        %v1063 = vadd.f32 %v763, %v985
        %v1064 = vadd.f32 %v764, %v1058
        %1065 = vst.msk [vmem:[#allocation5] sm:$0xff] %vm338, %v1061
        %1066 = vst.msk [vmem:[#allocation5 + $0x8] sm:$0xff] %vm338, %v1062
        %1067 = vst.msk [vmem:[#allocation5 + $0x10] sm:$0xff] %vm338, %v1063
        %1068 = vst.msk [vmem:[#allocation5 + $0x18] sm:$0xff] %vm338, %v1064
        %1069 = vst.msk [vmem:[#allocation3] sm:$0xff] %vm732, %v660
        %1070 = vst.msk [vmem:[#allocation3 + $0x8] sm:$0xff] %vm732, %v661
        %1071 = vst.msk [vmem:[#allocation3 + $0x10] sm:$0xff] %vm732, %v662
        %1072 = vst.msk [vmem:[#allocation3 + $0x18] sm:$0xff] %vm732, %v663
        // Predicated region
        $region49: #{tpu_custom_call.1} parent=31 // pred_check
          %p1073 = pneg %p300
        $region50: #{tpu_custom_call.1} parent=31 // pred_check_branch
          %1075 = sbr.rel (%p1073) target = $region52
        $region51: #{tpu_custom_call.1} parent=31 // pred_region
          %v1076 = vld [vmem:[#allocation4] sm:$0xff]
          %v1077 = vld [vmem:[#allocation4 + $0x8] sm:$0xff]
          %v1078 = vld [vmem:[#allocation4 + $0x10] sm:$0xff]
          %v1079 = vld [vmem:[#allocation4 + $0x18] sm:$0xff]
          %v1080 = vrcp.pop %v1076
          %v1081 = vrcp.pop %v1077
          %v1082 = vrcp.pop %v1078
          %v1083 = vrcp.pop %v1079
          %v1084 = vld [vmem:[#allocation5] sm:$0xff]
          %v1085 = vld [vmem:[#allocation5 + $0x8] sm:$0xff]
          %v1086 = vld [vmem:[#allocation5 + $0x10] sm:$0xff]
          %v1087 = vld [vmem:[#allocation5 + $0x18] sm:$0xff]
          %1089 = vset.pattern.permute.xlu0 0
          %1090 = vperm.xlu0 %1089, %v1080
          %v1091 = vpop.permute.xlu0 %1090
          %1094 = vset.pattern.permute.xlu0 0
          %1095 = vperm.xlu0 %1094, %v1081
          %v1096 = vpop.permute.xlu0 %1095
          %1099 = vset.pattern.permute.xlu0 0
          %1100 = vperm.xlu0 %1099, %v1082
          %v1101 = vpop.permute.xlu0 %1100
          %1104 = vset.pattern.permute.xlu0 0
          %1105 = vperm.xlu0 %1104, %v1083
          %v1106 = vpop.permute.xlu0 %1105
          %v1108 = vmul.f32 %v1084, %v1091
          %v1109 = vmul.f32 %v1085, %v1096
          %v1110 = vmul.f32 %v1086, %v1101
          %v1111 = vmul.f32 %v1087, %v1106
          %1112 = vst.msk [vmem:[%s295] sm:$0xff] %vm338, %v1108
          %1113 = vst.msk [vmem:[%s295 + $0x8] sm:$0xff] %vm338, %v1109
          %1114 = vst.msk [vmem:[%s295 + $0x10] sm:$0xff] %vm338, %v1110
          %1115 = vst.msk [vmem:[%s295 + $0x18] sm:$0xff] %vm338, %v1111
        $region52: #{tpu_custom_call.1} parent=31 // pred_fallthru
          _
        %s1116 = sand.u32 %s136, 1
        %s1117 = scalar_lea.sflag [#allocation8], %s1116
        %s1118 = sand.u32 %s136, 1
        %s1119 = smul.addr %s1118, 32
        %s1120 = scalar_lea.vmem [#allocation12], %s1119
        // Predicated region
        $region53: #{tpu_custom_call.1} parent=31 // pred_check
          %p1121 = pneg %p146
        $region54: #{tpu_custom_call.1} parent=31 // pred_check_branch
          %1123 = sbr.rel (%p1121) target = $region56
        $region55: #{tpu_custom_call.1} parent=31 // pred_region
          %s1124 = smul.u32 4, %s28
          %s1126 = ssub.s32 512, 512
          %1127 = vsyncadd %s1117, %s1126
          %s1128 = sadd.s32 %s29, %s1124
          %s1129 = smul.addr %s1128, 128
          %s1130 = scalar_lea.hbm %s3, %s1129
          %s1131 = sshll.u32 %s1120, 4
          %s1132 = int_to_ptr.vmem [resolvable:$true] %s1131
          %1137 = dma.vmem_to_hbm [thread:$0]  %s1132, 512, %s1130, %s1117, 128, 128, 8
        $region56: #{tpu_custom_call.1} parent=31 // pred_fallthru
          _
      $region32: #{tpu_custom_call.1} parent=5 // pred_fallthru
        _
      %p1138 = scmp.le.s32.totalorder 2, %s18
      // Predicated region
      $region57: #{tpu_custom_call.1} parent=5 // pred_check
        %p1139 = pneg %p1138
      $region58: #{tpu_custom_call.1} parent=5 // pred_check_branch
        %1141 = sbr.rel (%p1139) target = $region60
      $region59: #{tpu_custom_call.1} parent=5 // pred_region
        %s1142 = ssub.s32 %s18, 2
        // Predicated region
        $region61: #{tpu_custom_call.1} parent=59 // pred_check
          %p1143 = pneg %p152
        $region62: #{tpu_custom_call.1} parent=59 // pred_check_branch
          %1145 = sbr.rel (%p1143) target = $region64
        $region63: #{tpu_custom_call.1} parent=59 // pred_region
          %s1146 = sand.u32 %s137, 1
          %s1147 = scalar_lea.sflag [#allocation8], %s1146
          %s1148 = sand.u32 %s137, 1
          %s1149 = smul.addr %s1148, 32
          %s1150 = scalar_lea.vmem [#allocation12], %s1149
          %1151 = dma.done %s1147, 512
        $region64: #{tpu_custom_call.1} parent=59 // pred_fallthru
          _
      $region60: #{tpu_custom_call.1} parent=5 // pred_fallthru
        _
    $region6: #{tpu_custom_call.1} parent=1 // loop_footer
      %s22 = sadd.s32 1, %s18
    $region7: #{tpu_custom_call.1} parent=1 // loop_footer_branch
      %17 = sbr.rel target = $region3
    $region8: #{tpu_custom_call.1} parent=1 // loop_exit
      _
    %1152 = vsyncpa [#allocation7], 1
    %s1153 = scalar_lea.sflag [#allocation7], 1
    %1154 = vsyncpa %s1153, 1
    %1155 = vsyncpa [#allocation10], 1
    %s1156 = scalar_lea.sflag [#allocation10], 1
    %1157 = vsyncpa %s1156, 1
    %1158 = vsyncpa [#allocation8], 1
    %s1159 = scalar_lea.sflag [#allocation8], 1
    %1160 = vsyncpa %s1159, 1

</llo_original>
